<compile_context>
chip_gen: v7x
topology: tpu7x:2x2x1
jax: 0.10.0
libtpu: 0.0.40
codegen_flags: <defaults>
</compile_context>

<pallas_src>
import functools

import numpy as np

import jax
import jax.numpy as jnp
from jax import lax
from jax.experimental import pallas as pl
from jax.experimental.pallas import tpu as pltpu


# ----------------------------- fused Pallas kernel ---------------------------

def _fused_kernel(p3_ref, w1e_ref, b1_ref, a2_ref, b2t_ref,
                  wf1_ref, bf1_ref, wout_ref, bout_ref, o_ref, *, bt):
    """Whole forward for a batch tile of `bt` samples.

    p3_ref  : (bt, 108, 144) bf16  6x6/stride-2 patches (one per 2x2 pool window of
                                   conv1), features ordered (ci, r, c), s1 = i1*12+j1
    w1e_ref : (8, 108)  bf16       conv1 weight expanded over the 4 positions of a
                                   pool window, rows ordered (pool_pos, ch)
    b1_ref  : (1, 2, 1) f32        conv1 bias
    a2_ref  : (288, 1024) bf16     conv2 + 2x2-pool grouping as a dense map;
                                   rows = (ch, s1), cols = (pool_pos2, co, i2, j2)
    b2t_ref : (1, 256)  f32        conv2 bias tiled to the (co, i2, j2) column order
    wf1_ref : (256, 64) bf16       fc1 weight (transposed)
    bf1_ref : (1, 64)   f32        fc1 bias
    wout_ref: (64, 2)   f32        fc2*fc3 folded; columns = [o, -o] (cat((x, 1-x)))
    bout_ref: (1, 2)    f32        [b23, 1 - b23]
    o_ref   : (1, bt, 2) f32
    """
    # ---- conv1 over all 4 positions of every pool window: lane-dense batched GEMM
    w1e = jnp.broadcast_to(w1e_ref[...], (bt, 8, 108))
    y = jnp.einsum('brk,bks->brs', w1e, p3_ref[...],
                   preferred_element_type=jnp.float32)            # (bt, 8, 144)

    # 2x2 max-pool over pool positions (rows grouped (pool_pos, ch)); per-channel
    # bias + ReLU commute with the max, so they are applied once after pooling.
    m = jnp.maximum(jnp.maximum(y[:, 0:2, :], y[:, 2:4, :]),
                    jnp.maximum(y[:, 4:6, :], y[:, 6:8, :]))       # (bt, 2, 144)
    a1 = jnp.maximum(m + b1_ref[...], 0.0)

    # ---- conv2 (+ pool grouping): both conv1 channels folded into ONE GEMM.
    # LHS columns ordered (ch, s1) to match a2's row order.
    l2 = jnp.concatenate([a1[:, 0, :], a1[:, 1, :]], axis=-1)      # (bt, 288)
    z = jnp.dot(l2.astype(a2_ref.dtype), a2_ref[...],
                preferred_element_type=jnp.float32)                # (bt, 1024)
    pooled = jnp.maximum(jnp.maximum(z[:, 0:256], z[:, 256:512]),
                         jnp.maximum(z[:, 512:768], z[:, 768:1024]))
    flat = jnp.maximum(pooled + b2t_ref[...], 0.0)                 # (bt, 256) torch view order

    # ---- fc1 + ReLU, then fc2/fc3/cat((x, 1-x)) folded into one (64, 2) affine
    h = jnp.maximum(jnp.dot(flat.astype(wf1_ref.dtype), wf1_ref[...],
                            preferred_element_type=jnp.float32) + bf1_ref[...], 0.0)
    out = jnp.dot(h, wout_ref[...], preferred_element_type=jnp.float32) + bout_ref[...]
    o_ref[0] = out.astype(o_ref.dtype)


# -------------------- conv2 folded into a dense (288, 1024) map ---------------

@functools.lru_cache(maxsize=1)
def _conv2_dense_plan():
    """Static scatter pattern mapping conv2 OIHW weights into the dense table."""
    idx = np.zeros((2, 144, 1024), np.int32)
    msk = np.zeros((2, 144, 1024), np.float32)
    for di in range(2):
        for dj in range(2):
            p2 = di * 2 + dj
            for co in range(16):
                for i2 in range(4):
                    for j2 in range(4):
                        col = p2 * 256 + co * 16 + i2 * 4 + j2
                        for ki in range(5):
                            for kj in range(5):
                                r = 2 * i2 + di + ki
                                c = 2 * j2 + dj + kj
                                s1 = r * 12 + c
                                for c1 in range(2):
                                    idx[c1, s1, col] = co * 50 + c1 * 25 + ki * 5 + kj
                                    msk[c1, s1, col] = 1.0
    return jnp.asarray(idx), jnp.asarray(msk)


# ------------------------- one-time weight folding -----------------------------

def fold_params(params):
    """Fold the PyTorch parameters into the layout the kernel consumes.

    Call ONCE at model-load time (hoisted out of the jitted inference path) and
    reuse the result for every forward call.
    """
    w1, b1, w2, b2, wf1, bf1, wf2, bf2, wf3, bf3 = params

    # conv1 weight expanded over the 4 positions of a 2x2 pool window (6x6 patch):
    # row (pool_pos*2 + ch), feature (ci, r, c).
    w1p = jnp.pad(w1, ((0, 0), (0, 0), (0, 1), (0, 1)))            # (2, 3, 6, 6)
    rows = []
    for di in range(2):
        for dj in range(2):
            rows.append(jnp.roll(w1p, (di, dj), axis=(2, 3)).reshape(2, 108))
    w1e = jnp.stack(rows, axis=0).reshape(8, 108).astype(jnp.bfloat16)
    b1r = b1.reshape(1, 2, 1).astype(jnp.float32)

    # conv2 (+ 2x2-pool grouping) as one dense (288, 1024) matrix, rows (ch, s1).
    idx, msk = _conv2_dense_plan()
    tbl = w2.reshape(-1)[idx] * msk                                 # (2, 144, 1024)
    a2 = jnp.concatenate([tbl[0], tbl[1]], axis=0).astype(jnp.bfloat16)
    b2t = jnp.repeat(b2, 16).reshape(1, 256).astype(jnp.float32)    # (co, i2, j2) order

    wf1t = wf1.T.astype(jnp.bfloat16)                               # (256, 64)
    bf1r = bf1.reshape(1, 64).astype(jnp.float32)

    s3 = wf3[0, 0]                                                  # fc3 is Linear(1, 1)
    w23 = wf2.reshape(64, 1) * s3                                   # fc2 folded into fc3
    wout = jnp.concatenate([w23, -w23], axis=1).astype(jnp.float32)  # cat((x, 1-x)) folded
    b23 = bf2[0] * s3 + bf3[0]
    bout = jnp.stack([b23, 1.0 - b23]).reshape(1, 2).astype(jnp.float32)
    return (w1e, b1r, a2, b2t, wf1t, bf1r, wout, bout)


# --------------------------------- forward -----------------------------------

def _pick_batch_tile(B):
    # >= 2 grid steps whenever B > 1 (v7x has 2 TensorCores); tile capped at 8 so
    # the double-buffered patch block stays small on every TPU generation.
    if B >= 16:
        bt = 8
    elif B > 1:
        bt = max(1, B // 2)
    else:
        bt = 1
    nb = -(-B // bt)
    return bt, nb


@jax.jit
def hybrid_qnn_shallow_forward(x, folded):
    B = x.shape[0]
    bt, nb = _pick_batch_tile(B)
    Bp = nb * bt

    # One 6x6/stride-2 patch per 2x2 pool window of conv1 (the 4 conv positions of a
    # pool window share it): ~2.7x less patch data than 5x5/stride-1 patches, and the
    # natural (B, feat, spatial) order needs no host-side transpose.
    p = lax.conv_general_dilated_patches(
        x, (6, 6), (2, 2), 'VALID',
        dimension_numbers=('NCHW', 'OIHW', 'NCHW'))                 # (B, 108, 12, 12)
    p3 = p.reshape(B, 108, 144).astype(jnp.bfloat16)
    if Bp != B:                                                     # ragged batch: pad
        p3 = jnp.pad(p3, ((0, Bp - B), (0, 0), (0, 0)))

    w1e, b1r, a2, b2t, wf1t, bf1r, wout, bout = folded

    out = pl.pallas_call(
        functools.partial(_fused_kernel, bt=bt),
        out_shape=jax.ShapeDtypeStruct((nb, bt, 2), jnp.float32),
        grid=(nb,),
        in_specs=[
            pl.BlockSpec((bt, 108, 144), lambda i: (i, 0, 0)),      # patches (batch-tiled)
            pl.BlockSpec((8, 108), lambda i: (0, 0)),
            pl.BlockSpec((1, 2, 1), lambda i: (0, 0, 0)),
            pl.BlockSpec((288, 1024), lambda i: (0, 0)),
            pl.BlockSpec((1, 256), lambda i: (0, 0)),
            pl.BlockSpec((256, 64), lambda i: (0, 0)),
            pl.BlockSpec((1, 64), lambda i: (0, 0)),
            pl.BlockSpec((64, 2), lambda i: (0, 0)),
            pl.BlockSpec((1, 2), lambda i: (0, 0)),
        ],
        out_specs=pl.BlockSpec((1, bt, 2), lambda i: (i, 0, 0)),
        compiler_params=pltpu.CompilerParams(
            dimension_semantics=("parallel",)),
    )(p3, w1e, b1r, a2, b2t, wf1t, bf1r, wout, bout)

    return out.reshape(Bp, 2)[:B]


# ------------------------- deterministic parameters ---------------------------

def init_params(key):
    def u(k, shape, fan_in):
        bound = 1.0 / (fan_in ** 0.5)
        return jax.random.uniform(k, shape, jnp.float32, -bound, bound)
    ks = jax.random.split(key, 10)
    w1 = u(ks[0], (2, 3, 5, 5), 75);    b1 = u(ks[1], (2,), 75)      # conv1
    w2 = u(ks[2], (16, 2, 5, 5), 50);   b2 = u(ks[3], (16,), 50)     # conv2
    wf1 = u(ks[4], (64, 256), 256);     bf1 = u(ks[5], (64,), 256)   # fc1
    wf2 = u(ks[6], (1, 64), 64);        bf2 = u(ks[7], (1,), 64)     # fc2 (n_qubits=1)
    wf3 = u(ks[8], (1, 1), 1);          bf3 = u(ks[9], (1,), 1)      # fc3
    return (w1, b1, w2, b2, wf1, bf1, wf2, bf2, wf3, bf3)


# --------------------------- pure-JAX reference -------------------------------

def reference_forward(x, params):
    w1, b1, w2, b2, wf1, bf1, wf2, bf2, wf3, bf3 = params
    dn = ('NCHW', 'OIHW', 'NCHW')
    hp = jax.lax.Precision.HIGHEST
    y = lax.conv_general_dilated(x, w1, (1, 1), 'VALID', dimension_numbers=dn, precision=hp)
    y = jnp.maximum(y + b1[None, :, None, None], 0.0)
    y = lax.reduce_window(y, -jnp.inf, lax.max, (1, 1, 2, 2), (1, 1, 2, 2), 'VALID')
    y = lax.conv_general_dilated(y, w2, (1, 1), 'VALID', dimension_numbers=dn, precision=hp)
    y = jnp.maximum(y + b2[None, :, None, None], 0.0)
    y = lax.reduce_window(y, -jnp.inf, lax.max, (1, 1, 2, 2), (1, 1, 2, 2), 'VALID')
    f = y.reshape(y.shape[0], -1)
    h = jnp.maximum(jnp.dot(f, wf1.T, precision=hp) + bf1, 0.0)
    q = jnp.dot(h, wf2.T, precision=hp) + bf2
    o = jnp.dot(q, wf3.T, precision=hp) + bf3
    return jnp.concatenate([o, 1.0 - o], axis=-1)


if __name__ == "__main__":
    key = jax.random.PRNGKey(0)
    kx, kp = jax.random.split(key)
    # 28x28 spatial with 3 channels is what the forward implies (flatten dim = 16*4*4 = 256).
    x = jax.random.normal(kx, (2, 3, 28, 28), jnp.float32)   # NCHW
    params = init_params(kp)
    folded = fold_params(params)   # one-time folding, hoisted out of the jitted path

    out = jax.block_until_ready(hybrid_qnn_shallow_forward(x, folded))
    ref = jax.block_until_ready(reference_forward(x, params))

    assert out.shape == (2, 2) and out.dtype == jnp.float32
    err = float(jnp.max(jnp.abs(out - ref)))
    # bf16 GEMM operands with f32 accumulation vs a HIGHEST-precision f32 reference:
    # observed error is ~1e-3; 5e-2 leaves a comfortable margin.
    assert err < 5e-2, f"max abs diff vs reference: {err}"
    print("KERNEL_OK")
</pallas_src>

<mosaic_0001>
module attributes {stable_mosaic.version = 11 : i64} {
  func.func @_fused_kernel(%arg0: i32, %arg1: memref<1x108x144xbf16, #tpu.memory_space<vmem>>, %arg2: memref<8x108xbf16, #tpu.memory_space<vmem>>, %arg3: memref<1x2x1xf32, #tpu.memory_space<vmem>>, %arg4: memref<288x1024xbf16, #tpu.memory_space<vmem>>, %arg5: memref<1x256xf32, #tpu.memory_space<vmem>>, %arg6: memref<256x64xbf16, #tpu.memory_space<vmem>>, %arg7: memref<1x64xf32, #tpu.memory_space<vmem>>, %arg8: memref<64x2xf32, #tpu.memory_space<vmem>>, %arg9: memref<1x2xf32, #tpu.memory_space<vmem>>, %arg10: memref<1x1x2xf32, #tpu.memory_space<vmem>>) attributes {dimension_semantics = [#tpu.dimension_semantics<parallel>], iteration_bounds = array<i64: 2>, scalar_prefetch = 0 : i64, scratch_operands = 0 : i64, tpu.core_type = #tpu.core_type<tc>, window_params = [{transform_indices = @transform_0, window_bounds = array<i64: 1, 108, 144>}, {pipeline_mode = #tpu.pipeline_mode<synchronous>, transform_indices = @transform_1, window_bounds = array<i64: 8, 108>}, {pipeline_mode = #tpu.pipeline_mode<synchronous>, transform_indices = @transform_2, window_bounds = array<i64: 1, 2, 1>}, {pipeline_mode = #tpu.pipeline_mode<synchronous>, transform_indices = @transform_3, window_bounds = array<i64: 288, 1024>}, {pipeline_mode = #tpu.pipeline_mode<synchronous>, transform_indices = @transform_4, window_bounds = array<i64: 1, 256>}, {pipeline_mode = #tpu.pipeline_mode<synchronous>, transform_indices = @transform_5, window_bounds = array<i64: 256, 64>}, {pipeline_mode = #tpu.pipeline_mode<synchronous>, transform_indices = @transform_6, window_bounds = array<i64: 1, 64>}, {pipeline_mode = #tpu.pipeline_mode<synchronous>, transform_indices = @transform_7, window_bounds = array<i64: 64, 2>}, {pipeline_mode = #tpu.pipeline_mode<synchronous>, transform_indices = @transform_8, window_bounds = array<i64: 1, 2>}, {transform_indices = @transform_9, window_bounds = array<i64: 1, 1, 2>}]} {
    %c0 = arith.constant 0 : index
    %c0_0 = arith.constant 0 : index
    %0 = vector.load %arg2[%c0, %c0_0] : memref<8x108xbf16, #tpu.memory_space<vmem>>, vector<8x108xbf16>
    %1 = vector.shape_cast %0 : vector<8x108xbf16> to vector<1x8x108xbf16>
    %c0_1 = arith.constant 0 : index
    %c0_2 = arith.constant 0 : index
    %c0_3 = arith.constant 0 : index
    %2 = vector.load %arg1[%c0_1, %c0_2, %c0_3] : memref<1x108x144xbf16, #tpu.memory_space<vmem>>, vector<1x108x144xbf16>
    "tpu.trace_start"() <{level = 10 : i32, message = "brk,bks->brs"}> : () -> ()
    %cst = arith.constant dense<0.000000e+00> : vector<1x8x144xf32>
    %3 = tpu.matmul %1, %2, %cst {dimension_numbers = #tpu.dot_dimension_numbers<[2], [1], [1], [2], [0, 0, 0, 1, 1, 2], [0], [0]>} : vector<1x8x108xbf16>, vector<1x108x144xbf16>, vector<1x8x144xf32> -> vector<1x8x144xf32>
    "tpu.trace_stop"() : () -> ()
    %4 = vector.extract_strided_slice %3 {offsets = [0, 0, 0], sizes = [1, 2, 144], strides = [1, 1, 1]} : vector<1x8x144xf32> to vector<1x2x144xf32>
    %5 = vector.extract_strided_slice %3 {offsets = [0, 2, 0], sizes = [1, 2, 144], strides = [1, 1, 1]} : vector<1x8x144xf32> to vector<1x2x144xf32>
    %6 = arith.maximumf %4, %5 : vector<1x2x144xf32>
    %7 = vector.extract_strided_slice %3 {offsets = [0, 4, 0], sizes = [1, 2, 144], strides = [1, 1, 1]} : vector<1x8x144xf32> to vector<1x2x144xf32>
    %8 = vector.extract_strided_slice %3 {offsets = [0, 6, 0], sizes = [1, 2, 144], strides = [1, 1, 1]} : vector<1x8x144xf32> to vector<1x2x144xf32>
    %9 = arith.maximumf %7, %8 : vector<1x2x144xf32>
    %10 = arith.maximumf %6, %9 : vector<1x2x144xf32>
    %c0_4 = arith.constant 0 : index
    %c0_5 = arith.constant 0 : index
    %c0_6 = arith.constant 0 : index
    %11 = vector.load %arg3[%c0_4, %c0_5, %c0_6] : memref<1x2x1xf32, #tpu.memory_space<vmem>>, vector<1x2x1xf32>
    %12 = vector.broadcast %11 : vector<1x2x1xf32> to vector<1x2x144xf32>
    %13 = arith.addf %10, %12 : vector<1x2x144xf32>
    %cst_7 = arith.constant 0.000000e+00 : f32
    %14 = vector.broadcast %cst_7 : f32 to vector<1x2x144xf32>
    %15 = arith.maximumf %13, %14 : vector<1x2x144xf32>
    %16 = vector.extract_strided_slice %15 {offsets = [0, 0, 0], sizes = [1, 1, 144], strides = [1, 1, 1]} : vector<1x2x144xf32> to vector<1x1x144xf32>
    %17 = vector.shape_cast %16 : vector<1x1x144xf32> to vector<1x144xf32>
    %18 = vector.extract_strided_slice %15 {offsets = [0, 1, 0], sizes = [1, 1, 144], strides = [1, 1, 1]} : vector<1x2x144xf32> to vector<1x1x144xf32>
    %19 = vector.shape_cast %18 : vector<1x1x144xf32> to vector<1x144xf32>
    %20 = tpu.concatenate %17, %19 in 1 : vector<1x144xf32>, vector<1x144xf32> -> vector<1x288xf32>
    %21 = arith.truncf %20 : vector<1x288xf32> to vector<1x288xbf16>
    %c0_8 = arith.constant 0 : index
    %c0_9 = arith.constant 0 : index
    %22 = vector.load %arg4[%c0_8, %c0_9] : memref<288x1024xbf16, #tpu.memory_space<vmem>>, vector<288x1024xbf16>
    %cst_10 = arith.constant dense<0.000000e+00> : vector<1x1024xf32>
    %23 = tpu.matmul %21, %22, %cst_10 {dimension_numbers = #tpu.dot_dimension_numbers<[1], [0], [0], [1], [0, 0, 1, 1], [], []>} : vector<1x288xbf16>, vector<288x1024xbf16>, vector<1x1024xf32> -> vector<1x1024xf32>
    %24 = vector.extract_strided_slice %23 {offsets = [0, 0], sizes = [1, 256], strides = [1, 1]} : vector<1x1024xf32> to vector<1x256xf32>
    %25 = vector.extract_strided_slice %23 {offsets = [0, 256], sizes = [1, 256], strides = [1, 1]} : vector<1x1024xf32> to vector<1x256xf32>
    %26 = arith.maximumf %24, %25 : vector<1x256xf32>
    %27 = vector.extract_strided_slice %23 {offsets = [0, 512], sizes = [1, 256], strides = [1, 1]} : vector<1x1024xf32> to vector<1x256xf32>
    %28 = vector.extract_strided_slice %23 {offsets = [0, 768], sizes = [1, 256], strides = [1, 1]} : vector<1x1024xf32> to vector<1x256xf32>
    %29 = arith.maximumf %27, %28 : vector<1x256xf32>
    %30 = arith.maximumf %26, %29 : vector<1x256xf32>
    %c0_11 = arith.constant 0 : index
    %c0_12 = arith.constant 0 : index
    %31 = vector.load %arg5[%c0_11, %c0_12] : memref<1x256xf32, #tpu.memory_space<vmem>>, vector<1x256xf32>
    %32 = arith.addf %30, %31 : vector<1x256xf32>
    %cst_13 = arith.constant 0.000000e+00 : f32
    %33 = vector.broadcast %cst_13 : f32 to vector<1x256xf32>
    %34 = arith.maximumf %32, %33 : vector<1x256xf32>
    %35 = arith.truncf %34 : vector<1x256xf32> to vector<1x256xbf16>
    %c0_14 = arith.constant 0 : index
    %c0_15 = arith.constant 0 : index
    %36 = vector.load %arg6[%c0_14, %c0_15] : memref<256x64xbf16, #tpu.memory_space<vmem>>, vector<256x64xbf16>
    %cst_16 = arith.constant dense<0.000000e+00> : vector<1x64xf32>
    %37 = tpu.matmul %35, %36, %cst_16 {dimension_numbers = #tpu.dot_dimension_numbers<[1], [0], [0], [1], [0, 0, 1, 1], [], []>} : vector<1x256xbf16>, vector<256x64xbf16>, vector<1x64xf32> -> vector<1x64xf32>
    %c0_17 = arith.constant 0 : index
    %c0_18 = arith.constant 0 : index
    %38 = vector.load %arg7[%c0_17, %c0_18] : memref<1x64xf32, #tpu.memory_space<vmem>>, vector<1x64xf32>
    %39 = arith.addf %37, %38 : vector<1x64xf32>
    %cst_19 = arith.constant 0.000000e+00 : f32
    %40 = vector.broadcast %cst_19 : f32 to vector<1x64xf32>
    %41 = arith.maximumf %39, %40 : vector<1x64xf32>
    %c0_20 = arith.constant 0 : index
    %c0_21 = arith.constant 0 : index
    %42 = vector.load %arg8[%c0_20, %c0_21] : memref<64x2xf32, #tpu.memory_space<vmem>>, vector<64x2xf32>
    %cst_22 = arith.constant dense<0.000000e+00> : vector<1x2xf32>
    %43 = tpu.matmul %41, %42, %cst_22 {dimension_numbers = #tpu.dot_dimension_numbers<[1], [0], [0], [1], [0, 0, 1, 1], [], []>} : vector<1x64xf32>, vector<64x2xf32>, vector<1x2xf32> -> vector<1x2xf32>
    %c0_23 = arith.constant 0 : index
    %c0_24 = arith.constant 0 : index
    %44 = vector.load %arg9[%c0_23, %c0_24] : memref<1x2xf32, #tpu.memory_space<vmem>>, vector<1x2xf32>
    %45 = arith.addf %43, %44 : vector<1x2xf32>
    %c0_25 = arith.constant 0 : index
    %c0_26 = arith.constant 0 : index
    %c0_27 = arith.constant 0 : index
    %46 = vector.load %arg10[%c0_25, %c0_26, %c0_27] : memref<1x1x2xf32, #tpu.memory_space<vmem>>, vector<1x1x2xf32>
    %47 = vector.shape_cast %46 : vector<1x1x2xf32> to vector<1x2xf32>
    %48 = vector.shape_cast %45 : vector<1x2xf32> to vector<1x1x2xf32>
    tpu.vector_store %arg10[%c0_25, %c0_26, %c0_27], %48 {strides = array<i32>} : memref<1x1x2xf32, #tpu.memory_space<vmem>>, vector<1x1x2xf32>,
    return
  }
  func.func @transform_0(%arg0: i32) -> (i32, i32, i32) {
    %c0_i32 = arith.constant 0 : i32
    %c0_i32_0 = arith.constant 0 : i32
    %c0_i32_1 = arith.constant 0 : i32
    return %arg0, %c0_i32, %c0_i32_0 : i32, i32, i32
  }
  func.func @transform_1(%arg0: i32) -> (i32, i32) {
    %c0_i32 = arith.constant 0 : i32
    %c0_i32_0 = arith.constant 0 : i32
    %c0_i32_1 = arith.constant 0 : i32
    return %c0_i32, %c0_i32_0 : i32, i32
  }
  func.func @transform_2(%arg0: i32) -> (i32, i32, i32) {
    %c0_i32 = arith.constant 0 : i32
    %c0_i32_0 = arith.constant 0 : i32
    %c0_i32_1 = arith.constant 0 : i32
    %c0_i32_2 = arith.constant 0 : i32
    return %c0_i32, %c0_i32_0, %c0_i32_1 : i32, i32, i32
  }
  func.func @transform_3(%arg0: i32) -> (i32, i32) {
    %c0_i32 = arith.constant 0 : i32
    %c0_i32_0 = arith.constant 0 : i32
    %c0_i32_1 = arith.constant 0 : i32
    return %c0_i32, %c0_i32_0 : i32, i32
  }
  func.func @transform_4(%arg0: i32) -> (i32, i32) {
    %c0_i32 = arith.constant 0 : i32
    %c0_i32_0 = arith.constant 0 : i32
    %c0_i32_1 = arith.constant 0 : i32
    return %c0_i32, %c0_i32_0 : i32, i32
  }
  func.func @transform_5(%arg0: i32) -> (i32, i32) {
    %c0_i32 = arith.constant 0 : i32
    %c0_i32_0 = arith.constant 0 : i32
    %c0_i32_1 = arith.constant 0 : i32
    return %c0_i32, %c0_i32_0 : i32, i32
  }
  func.func @transform_6(%arg0: i32) -> (i32, i32) {
    %c0_i32 = arith.constant 0 : i32
    %c0_i32_0 = arith.constant 0 : i32
    %c0_i32_1 = arith.constant 0 : i32
    return %c0_i32, %c0_i32_0 : i32, i32
  }
  func.func @transform_7(%arg0: i32) -> (i32, i32) {
    %c0_i32 = arith.constant 0 : i32
    %c0_i32_0 = arith.constant 0 : i32
    %c0_i32_1 = arith.constant 0 : i32
    return %c0_i32, %c0_i32_0 : i32, i32
  }
  func.func @transform_8(%arg0: i32) -> (i32, i32) {
    %c0_i32 = arith.constant 0 : i32
    %c0_i32_0 = arith.constant 0 : i32
    %c0_i32_1 = arith.constant 0 : i32
    return %c0_i32, %c0_i32_0 : i32, i32
  }
  func.func @transform_9(%arg0: i32) -> (i32, i32, i32) {
    %c0_i32 = arith.constant 0 : i32
    %c0_i32_0 = arith.constant 0 : i32
    %c0_i32_1 = arith.constant 0 : i32
    return %arg0, %c0_i32, %c0_i32_0 : i32, i32, i32
  }
}

</mosaic_0001>

<llo_original>
// kernel: hybrid_qnn_shallow_forward.1
$region0: #{hybrid_qnn_shallow_forward.1}
  #allocation0 [shape = 'u32[]', space=smem, size = 0x4, offset = 0x4, fixed_abs, tag = 'smem constant byte address 0x4 - core index']
  #allocation1 [shape = 'u32[144,128]{1,0:T(1,128)}', space=vmem, size = 0x12000, scoped, tag = 'internal scratch']
  %s0 = inlined_call_operand.vmem [shape: bf16[2,108,144], index: 0, kind: input, shape index: {}]
  %s1 = inlined_call_operand.vmem [shape: bf16[8,108], index: 1, kind: input, shape index: {}]
  %s2 = inlined_call_operand.vmem [shape: f32[1,2,1], index: 2, kind: input, shape index: {}]
  %s3 = inlined_call_operand.vmem [shape: bf16[288,1024], index: 3, kind: input, shape index: {}]
  %s4 = inlined_call_operand.vmem [shape: f32[1,256], index: 4, kind: input, shape index: {}]
  %s5 = inlined_call_operand.vmem [shape: bf16[256,64], index: 5, kind: input, shape index: {}]
  %s6 = inlined_call_operand.vmem [shape: f32[1,64], index: 6, kind: input, shape index: {}]
  %s7 = inlined_call_operand.vmem [shape: f32[64,2], index: 7, kind: input, shape index: {}]
  %s8 = inlined_call_operand.vmem [shape: f32[1,2], index: 8, kind: input, shape index: {}]
  %s9 = inlined_call_operand.hbm [shape: f32[2,1,2], index: 9, kind: output, shape index: {}]
  %s10 = sld [smem:[#allocation0]]
  $region69: #{hybrid_qnn_shallow_forward.1} parent=0
    _
  %s12 = ssub.s32 1, %s10
  %s13 = scalar_select 0, %s12, %s10
  $region1: #{hybrid_qnn_shallow_forward.1} parent=0
    #allocation2 [shape = 'u8[1024]{0}', space=vmem, size = 0x400, scoped, tag = 'output window, operand 0']
    #allocation3 [shape = 's32[2]{0}', space=sflag, size = 0x8, scoped, tag = 'scoped memory for hybrid_qnn_shallow_forward.1']
    %14 = vsyncpa [#allocation3], 0
    %s15 = scalar_lea.sflag [#allocation3], 1
    %16 = vsyncpa %s15, 0
    loop: start=0, step=1, limit=4
    $region2: #{hybrid_qnn_shallow_forward.1} parent=1 // loop_pre_header
      _
    $region3: #{hybrid_qnn_shallow_forward.1} parent=1 // loop_header
      %s18 = sphi 0, %s22
      %p19 = scmp.ge.s32.totalorder %s18, 4
      %s28 = sphi 0, %s30
      %s31 = sphi 0, %s28
      %s32 = sphi 0, %s31
      %s48 = sphi 0, %s32
      %s52 = sphi 0, %s52
      %s54 = sphi 0, %s52
      %s55 = sphi 0, %s54
      %s69 = sphi 0, %s55
      %s73 = sphi 0, %s73
      %s75 = sphi 0, %s73
      %s76 = sphi 0, %s75
      %s90 = sphi 0, %s76
      %s94 = sphi 0, %s94
      %s96 = sphi 0, %s94
      %s97 = sphi 0, %s96
      %s111 = sphi 0, %s97
      %s115 = sphi 0, %s115
      %s117 = sphi 0, %s115
      %s118 = sphi 0, %s117
      %s132 = sphi 0, %s118
      %s136 = sphi 0, %s136
      %s138 = sphi 0, %s136
      %s139 = sphi 0, %s138
      %s153 = sphi 0, %s139
      %s157 = sphi 0, %s157
      %s159 = sphi 0, %s157
      %s160 = sphi 0, %s159
      %s174 = sphi 0, %s160
      %s178 = sphi 0, %s178
      %s180 = sphi 0, %s178
      %s181 = sphi 0, %s180
      %s195 = sphi 0, %s181
      %s199 = sphi 0, %s199
      %s201 = sphi 0, %s199
      %s202 = sphi 0, %s201
      %s216 = sphi 0, %s202
      %s222 = sphi 0, %s224
      %s225 = sphi 0, %s222
      %s226 = sphi 0, %s225
      %s242 = sphi 0, %s226
    $region4: #{hybrid_qnn_shallow_forward.1} parent=1 // loop_header_branch
      %21 = sbr.rel (%p19) target = $region8
    $region5: #{hybrid_qnn_shallow_forward.1} parent=1 // loop_body
      %s23 = ssub.s32 %s18, 1
      %s24 = ssub.s32 %s18, 2
      %s25 = sadd.s32 %s18, 1
      %s26 = ssub.s32 %s18, %s25
      %p27 = scmp.eq.s32.totalorder %s26, 0
      %s29 = sadd.s32 %s28, 1
      %s30 = scalar_select %p27, %s28, %s29
      %p33 = pneg %p27
      %p34 = scmp.eq.s32.totalorder %s18, 1
      %p35 = por %p33, %p34
      %p36 = scmp.ne.s32.totalorder %s28, %s31
      %p37 = scmp.eq.s32.totalorder %s18, 0
      %p38 = por %p36, %p37
      %p39 = scmp.ne.s32.totalorder %s28, %s31
      %p40 = scmp.eq.s32.totalorder %s23, 1
      %p41 = por %p39, %p40
      %p42 = scmp.ne.s32.totalorder %s31, %s32
      %p43 = scmp.eq.s32.totalorder %s23, 0
      %p44 = por %p42, %p43
      %p45 = scmp.ne.s32.totalorder %s31, %s32
      %p46 = scmp.eq.s32.totalorder %s24, 1
      %p47 = por %p45, %p46
      %p49 = scmp.ne.s32.totalorder %s32, %s48
      %p50 = scmp.eq.s32.totalorder %s24, 0
      %p51 = por %p49, %p50
      %s53 = sadd.s32 %s52, 1
      %p56 = scmp.eq.s32.totalorder %s18, 1
      %p57 = scmp.ne.s32.totalorder %s52, %s54
      %p58 = scmp.eq.s32.totalorder %s18, 0
      %p59 = por %p57, %p58
      %p60 = scmp.ne.s32.totalorder %s52, %s54
      %p61 = scmp.eq.s32.totalorder %s23, 1
      %p62 = por %p60, %p61
      %p63 = scmp.ne.s32.totalorder %s54, %s55
      %p64 = scmp.eq.s32.totalorder %s23, 0
      %p65 = por %p63, %p64
      %p66 = scmp.ne.s32.totalorder %s54, %s55
      %p67 = scmp.eq.s32.totalorder %s24, 1
      %p68 = por %p66, %p67
      %p70 = scmp.ne.s32.totalorder %s55, %s69
      %p71 = scmp.eq.s32.totalorder %s24, 0
      %p72 = por %p70, %p71
      %s74 = sadd.s32 %s73, 1
      %p77 = scmp.eq.s32.totalorder %s18, 1
      %p78 = scmp.ne.s32.totalorder %s73, %s75
      %p79 = scmp.eq.s32.totalorder %s18, 0
      %p80 = por %p78, %p79
      %p81 = scmp.ne.s32.totalorder %s73, %s75
      %p82 = scmp.eq.s32.totalorder %s23, 1
      %p83 = por %p81, %p82
      %p84 = scmp.ne.s32.totalorder %s75, %s76
      %p85 = scmp.eq.s32.totalorder %s23, 0
      %p86 = por %p84, %p85
      %p87 = scmp.ne.s32.totalorder %s75, %s76
      %p88 = scmp.eq.s32.totalorder %s24, 1
      %p89 = por %p87, %p88
      %p91 = scmp.ne.s32.totalorder %s76, %s90
      %p92 = scmp.eq.s32.totalorder %s24, 0
      %p93 = por %p91, %p92
      %s95 = sadd.s32 %s94, 1
      %p98 = scmp.eq.s32.totalorder %s18, 1
      %p99 = scmp.ne.s32.totalorder %s94, %s96
      %p100 = scmp.eq.s32.totalorder %s18, 0
      %p101 = por %p99, %p100
      %p102 = scmp.ne.s32.totalorder %s94, %s96
      %p103 = scmp.eq.s32.totalorder %s23, 1
      %p104 = por %p102, %p103
      %p105 = scmp.ne.s32.totalorder %s96, %s97
      %p106 = scmp.eq.s32.totalorder %s23, 0
      %p107 = por %p105, %p106
      %p108 = scmp.ne.s32.totalorder %s96, %s97
      %p109 = scmp.eq.s32.totalorder %s24, 1
      %p110 = por %p108, %p109
      %p112 = scmp.ne.s32.totalorder %s97, %s111
      %p113 = scmp.eq.s32.totalorder %s24, 0
      %p114 = por %p112, %p113
      %s116 = sadd.s32 %s115, 1
      %p119 = scmp.eq.s32.totalorder %s18, 1
      %p120 = scmp.ne.s32.totalorder %s115, %s117
      %p121 = scmp.eq.s32.totalorder %s18, 0
      %p122 = por %p120, %p121
      %p123 = scmp.ne.s32.totalorder %s115, %s117
      %p124 = scmp.eq.s32.totalorder %s23, 1
      %p125 = por %p123, %p124
      %p126 = scmp.ne.s32.totalorder %s117, %s118
      %p127 = scmp.eq.s32.totalorder %s23, 0
      %p128 = por %p126, %p127
      %p129 = scmp.ne.s32.totalorder %s117, %s118
      %p130 = scmp.eq.s32.totalorder %s24, 1
      %p131 = por %p129, %p130
      %p133 = scmp.ne.s32.totalorder %s118, %s132
      %p134 = scmp.eq.s32.totalorder %s24, 0
      %p135 = por %p133, %p134
      %s137 = sadd.s32 %s136, 1
      %p140 = scmp.eq.s32.totalorder %s18, 1
      %p141 = scmp.ne.s32.totalorder %s136, %s138
      %p142 = scmp.eq.s32.totalorder %s18, 0
      %p143 = por %p141, %p142
      %p144 = scmp.ne.s32.totalorder %s136, %s138
      %p145 = scmp.eq.s32.totalorder %s23, 1
      %p146 = por %p144, %p145
      %p147 = scmp.ne.s32.totalorder %s138, %s139
      %p148 = scmp.eq.s32.totalorder %s23, 0
      %p149 = por %p147, %p148
      %p150 = scmp.ne.s32.totalorder %s138, %s139
      %p151 = scmp.eq.s32.totalorder %s24, 1
      %p152 = por %p150, %p151
      %p154 = scmp.ne.s32.totalorder %s139, %s153
      %p155 = scmp.eq.s32.totalorder %s24, 0
      %p156 = por %p154, %p155
      %s158 = sadd.s32 %s157, 1
      %p161 = scmp.eq.s32.totalorder %s18, 1
      %p162 = scmp.ne.s32.totalorder %s157, %s159
      %p163 = scmp.eq.s32.totalorder %s18, 0
      %p164 = por %p162, %p163
      %p165 = scmp.ne.s32.totalorder %s157, %s159
      %p166 = scmp.eq.s32.totalorder %s23, 1
      %p167 = por %p165, %p166
      %p168 = scmp.ne.s32.totalorder %s159, %s160
      %p169 = scmp.eq.s32.totalorder %s23, 0
      %p170 = por %p168, %p169
      %p171 = scmp.ne.s32.totalorder %s159, %s160
      %p172 = scmp.eq.s32.totalorder %s24, 1
      %p173 = por %p171, %p172
      %p175 = scmp.ne.s32.totalorder %s160, %s174
      %p176 = scmp.eq.s32.totalorder %s24, 0
      %p177 = por %p175, %p176
      %s179 = sadd.s32 %s178, 1
      %p182 = scmp.eq.s32.totalorder %s18, 1
      %p183 = scmp.ne.s32.totalorder %s178, %s180
      %p184 = scmp.eq.s32.totalorder %s18, 0
      %p185 = por %p183, %p184
      %p186 = scmp.ne.s32.totalorder %s178, %s180
      %p187 = scmp.eq.s32.totalorder %s23, 1
      %p188 = por %p186, %p187
      %p189 = scmp.ne.s32.totalorder %s180, %s181
      %p190 = scmp.eq.s32.totalorder %s23, 0
      %p191 = por %p189, %p190
      %p192 = scmp.ne.s32.totalorder %s180, %s181
      %p193 = scmp.eq.s32.totalorder %s24, 1
      %p194 = por %p192, %p193
      %p196 = scmp.ne.s32.totalorder %s181, %s195
      %p197 = scmp.eq.s32.totalorder %s24, 0
      %p198 = por %p196, %p197
      %s200 = sadd.s32 %s199, 1
      %p203 = scmp.eq.s32.totalorder %s18, 1
      %p204 = scmp.ne.s32.totalorder %s199, %s201
      %p205 = scmp.eq.s32.totalorder %s18, 0
      %p206 = por %p204, %p205
      %p207 = scmp.ne.s32.totalorder %s199, %s201
      %p208 = scmp.eq.s32.totalorder %s23, 1
      %p209 = por %p207, %p208
      %p210 = scmp.ne.s32.totalorder %s201, %s202
      %p211 = scmp.eq.s32.totalorder %s23, 0
      %p212 = por %p210, %p211
      %p213 = scmp.ne.s32.totalorder %s201, %s202
      %p214 = scmp.eq.s32.totalorder %s24, 1
      %p215 = por %p213, %p214
      %p217 = scmp.ne.s32.totalorder %s202, %s216
      %p218 = scmp.eq.s32.totalorder %s24, 0
      %p219 = por %p217, %p218
      %s220 = ssub.s32 %s18, %s25
      %p221 = scmp.eq.s32.totalorder %s220, 0
      %s223 = sadd.s32 %s222, 1
      %s224 = scalar_select %p221, %s222, %s223
      %p227 = pneg %p221
      %p228 = scmp.eq.s32.totalorder %s18, 1
      %p229 = por %p227, %p228
      %p230 = scmp.ne.s32.totalorder %s222, %s225
      %p231 = scmp.eq.s32.totalorder %s18, 0
      %p232 = por %p230, %p231
      %p233 = scmp.ne.s32.totalorder %s222, %s225
      %p234 = scmp.eq.s32.totalorder %s23, 1
      %p235 = por %p233, %p234
      %p236 = scmp.ne.s32.totalorder %s225, %s226
      %p237 = scmp.eq.s32.totalorder %s23, 0
      %p238 = por %p236, %p237
      %p239 = scmp.ne.s32.totalorder %s225, %s226
      %p240 = scmp.eq.s32.totalorder %s24, 1
      %p241 = por %p239, %p240
      %p243 = scmp.ne.s32.totalorder %s226, %s242
      %p244 = scmp.eq.s32.totalorder %s24, 0
      %p245 = por %p243, %p244
      %p246 = scmp.le.s32.totalorder 1, %s18
      %p247 = scmp.lt.s32.totalorder %s18, 3
      %p248 = pnand %p246, %p247
      %p249 = pneg %p248
      // Predicated region
      $region9: #{hybrid_qnn_shallow_forward.1} parent=5 // pred_check
        _
      $region10: #{hybrid_qnn_shallow_forward.1} parent=5 // pred_check_branch
        %251 = sbr.rel (%p248) target = $region12
      $region11: #{hybrid_qnn_shallow_forward.1} parent=5 // pred_region
        %s252 = ssub.s32 %s18, 1
        // Predicated region
        $region13: #{hybrid_qnn_shallow_forward.1} parent=11 // pred_check
          %p253 = pneg %p65
        $region14: #{hybrid_qnn_shallow_forward.1} parent=11 // pred_check_branch
          %255 = sbr.rel (%p253) target = $region16
        $region15: #{hybrid_qnn_shallow_forward.1} parent=11 // pred_region
          _
        $region16: #{hybrid_qnn_shallow_forward.1} parent=11 // pred_fallthru
          _
        // Predicated region
        $region17: #{hybrid_qnn_shallow_forward.1} parent=11 // pred_check
          %p256 = pneg %p86
        $region18: #{hybrid_qnn_shallow_forward.1} parent=11 // pred_check_branch
          %258 = sbr.rel (%p256) target = $region20
        $region19: #{hybrid_qnn_shallow_forward.1} parent=11 // pred_region
          _
        $region20: #{hybrid_qnn_shallow_forward.1} parent=11 // pred_fallthru
          _
        // Predicated region
        $region21: #{hybrid_qnn_shallow_forward.1} parent=11 // pred_check
          %p259 = pneg %p107
        $region22: #{hybrid_qnn_shallow_forward.1} parent=11 // pred_check_branch
          %261 = sbr.rel (%p259) target = $region24
        $region23: #{hybrid_qnn_shallow_forward.1} parent=11 // pred_region
          _
        $region24: #{hybrid_qnn_shallow_forward.1} parent=11 // pred_fallthru
          _
        // Predicated region
        $region25: #{hybrid_qnn_shallow_forward.1} parent=11 // pred_check
          %p262 = pneg %p128
        $region26: #{hybrid_qnn_shallow_forward.1} parent=11 // pred_check_branch
          %264 = sbr.rel (%p262) target = $region28
        $region27: #{hybrid_qnn_shallow_forward.1} parent=11 // pred_region
          _
        $region28: #{hybrid_qnn_shallow_forward.1} parent=11 // pred_fallthru
          _
        // Predicated region
        $region29: #{hybrid_qnn_shallow_forward.1} parent=11 // pred_check
          %p265 = pneg %p149
        $region30: #{hybrid_qnn_shallow_forward.1} parent=11 // pred_check_branch
          %267 = sbr.rel (%p265) target = $region32
        $region31: #{hybrid_qnn_shallow_forward.1} parent=11 // pred_region
          _
        $region32: #{hybrid_qnn_shallow_forward.1} parent=11 // pred_fallthru
          _
        // Predicated region
        $region33: #{hybrid_qnn_shallow_forward.1} parent=11 // pred_check
          %p268 = pneg %p170
        $region34: #{hybrid_qnn_shallow_forward.1} parent=11 // pred_check_branch
          %270 = sbr.rel (%p268) target = $region36
        $region35: #{hybrid_qnn_shallow_forward.1} parent=11 // pred_region
          _
        $region36: #{hybrid_qnn_shallow_forward.1} parent=11 // pred_fallthru
          _
        // Predicated region
        $region37: #{hybrid_qnn_shallow_forward.1} parent=11 // pred_check
          %p271 = pneg %p191
        $region38: #{hybrid_qnn_shallow_forward.1} parent=11 // pred_check_branch
          %273 = sbr.rel (%p271) target = $region40
        $region39: #{hybrid_qnn_shallow_forward.1} parent=11 // pred_region
          _
        $region40: #{hybrid_qnn_shallow_forward.1} parent=11 // pred_fallthru
          _
        // Predicated region
        $region41: #{hybrid_qnn_shallow_forward.1} parent=11 // pred_check
          %p274 = pneg %p212
        $region42: #{hybrid_qnn_shallow_forward.1} parent=11 // pred_check_branch
          %276 = sbr.rel (%p274) target = $region44
        $region43: #{hybrid_qnn_shallow_forward.1} parent=11 // pred_region
          _
        $region44: #{hybrid_qnn_shallow_forward.1} parent=11 // pred_fallthru
          _
      $region12: #{hybrid_qnn_shallow_forward.1} parent=5 // pred_fallthru
        _
      %p277 = scmp.lt.s32.totalorder %s18, 2
      // Predicated region
      $region45: #{hybrid_qnn_shallow_forward.1} parent=5 // pred_check
        %p278 = pneg %p277
      $region46: #{hybrid_qnn_shallow_forward.1} parent=5 // pred_check_branch
        %280 = sbr.rel (%p278) target = $region48
      $region47: #{hybrid_qnn_shallow_forward.1} parent=5 // pred_region
        // Predicated region
        $region49: #{hybrid_qnn_shallow_forward.1} parent=47 // pred_check
          %p281 = pneg %p38
        $region50: #{hybrid_qnn_shallow_forward.1} parent=47 // pred_check_branch
          %283 = sbr.rel (%p281) target = $region52
        $region51: #{hybrid_qnn_shallow_forward.1} parent=47 // pred_region
          %p284 = scmp.lt.s32.totalorder %s18, 1
          %s285 = scalar_select %p284, %s18, 1
          %s286 = smul.addr %s285, 28
          %s287 = smul.addr %s286, 4
          %s288 = scalar_lea.vmem %s0, %s287
        $region52: #{hybrid_qnn_shallow_forward.1} parent=47 // pred_fallthru
          _
      $region48: #{hybrid_qnn_shallow_forward.1} parent=5 // pred_fallthru
        _
      %p289 = scmp.le.s32.totalorder 1, %s18
      %p290 = scmp.lt.s32.totalorder %s18, 3
      %p291 = pnand %p289, %p290
      %p292 = pneg %p291
      // Predicated region
      $region53: #{hybrid_qnn_shallow_forward.1} parent=5 // pred_check
        _
      $region54: #{hybrid_qnn_shallow_forward.1} parent=5 // pred_check_branch
        %294 = sbr.rel (%p291) target = $region56
      $region55: #{hybrid_qnn_shallow_forward.1} parent=5 // pred_region
        %s295 = ssub.s32 %s18, 1
        %p296 = scmp.lt.s32.totalorder %s23, 1
        %s297 = scalar_select %p296, %s23, 1
        %s298 = smul.addr %s297, 28
        %s299 = smul.addr %s298, 4
        %s300 = scalar_lea.vmem %s0, %s299
        %p301 = pneg %p44
        %p302 = pneg %p41
        %p303 = pneg %p65
        %p304 = pneg %p62
        %p305 = pneg %p86
        %p306 = pneg %p83
        %p307 = pneg %p107
        %p308 = pneg %p104
        %p309 = pneg %p128
        %p310 = pneg %p125
        %p311 = pneg %p149
        %p312 = pneg %p146
        %p313 = pneg %p170
        %p314 = pneg %p167
        %p315 = pneg %p191
        %p316 = pneg %p188
        %p317 = pneg %p212
        %p318 = pneg %p209
        %p319 = pneg %p238
        %p320 = pneg %p235
        %s321 = sand.u32 %s225, 1
        %s322 = scalar_lea.sflag [#allocation3], %s321
        %s323 = sand.u32 %s225, 1
        %s324 = scalar_lea.vmem [#allocation2], %s323
        %p325 = scmp.lt.s32.totalorder %s23, 1
        %s326 = scalar_select %p325, %s23, 1
        %s327 = smul.addr %s326, 28
        %s328 = smul.addr %s327, 4
        %s329 = scalar_lea.vmem %s0, %s328
        %v331 = vld [vmem:[%s1] sm:$0xf]
        %v332 = vld [vmem:[%s329] sm:$0xff]
        %v333 = vld [vmem:[%s329 + $0x8] sm:$0xff]
        %v334 = vld [vmem:[%s329 + $0x10] sm:$0xff]
        %v335 = vld [vmem:[%s329 + $0x18] sm:$0xff]
        %v336 = vld [vmem:[%s329 + $0x20] sm:$0xff]
        %v337 = vld [vmem:[%s329 + $0x28] sm:$0xff]
        %v338 = vld [vmem:[%s329 + $0x30] sm:$0xff]
        %v339 = vld [vmem:[%s329 + $0x38] sm:$0xff]
        %v340 = vld [vmem:[%s329 + $0x40] sm:$0xff]
        %v341 = vld [vmem:[%s329 + $0x48] sm:$0xff]
        %v342 = vld [vmem:[%s329 + $0x50] sm:$0xff]
        %v343 = vld [vmem:[%s329 + $0x58] sm:$0xff]
        %v344 = vld [vmem:[%s329 + $0x60] sm:$0xff]
        %v345 = vld [vmem:[%s329 + $0x68] sm:$0x33]
        %v360 = vunpack.c.l.b16 %v332
        %v361 = vunpack.c.h.b16 %v332
        %v362 = vunpack.c.l.b16 %v333
        %v363 = vunpack.c.h.b16 %v333
        %v364 = vunpack.c.l.b16 %v334
        %v365 = vunpack.c.h.b16 %v334
        %v366 = vunpack.c.l.b16 %v335
        %v367 = vunpack.c.h.b16 %v335
        %v368 = vunpack.c.l.b16 %v336
        %v369 = vunpack.c.h.b16 %v336
        %v370 = vunpack.c.l.b16 %v337
        %v371 = vunpack.c.h.b16 %v337
        %v372 = vunpack.c.l.b16 %v338
        %v373 = vunpack.c.h.b16 %v338
        %v374 = vunpack.c.l.b16 %v339
        %v375 = vunpack.c.h.b16 %v339
        %v376 = vunpack.c.l.b16 %v340
        %v377 = vunpack.c.h.b16 %v340
        %v378 = vunpack.c.l.b16 %v341
        %v379 = vunpack.c.h.b16 %v341
        %v380 = vunpack.c.l.b16 %v342
        %v381 = vunpack.c.h.b16 %v342
        %v382 = vunpack.c.l.b16 %v343
        %v383 = vunpack.c.h.b16 %v343
        %v384 = vunpack.c.l.b16 %v344
        %v385 = vunpack.c.h.b16 %v344
        %v386 = vunpack.c.l.b16 %v345
        %v387 = vunpack.c.h.b16 %v345
        %v388 = vpack.c.b16 %v362, %v360
        %v389 = vpack.c.b16 %v363, %v361
        %v390 = vpack.c.b16 %v366, %v364
        %v391 = vpack.c.b16 %v367, %v365
        %v392 = vpack.c.b16 %v370, %v368
        %v393 = vpack.c.b16 %v371, %v369
        %v394 = vpack.c.b16 %v374, %v372
        %v395 = vpack.c.b16 %v375, %v373
        %v396 = vpack.c.b16 %v378, %v376
        %v397 = vpack.c.b16 %v379, %v377
        %v398 = vpack.c.b16 %v382, %v380
        %v399 = vpack.c.b16 %v383, %v381
        %v400 = vpack.c.b16 %v386, %v384
        %v401 = vpack.c.b16 %v387, %v385
        %vm414 = vcmask 883712
        %v416 = vsel %vm414, %v331, 0
        %vm418 = vcmask 1045504
        %v420 = vsel %vm418, %v400, 0
        %v423 = vsel %vm418, %v401, 0
        %425 = vmatprep.subr.bf16.mxu0 %v389
        %426 = vmatpush1.bf16.msra.mxu0 %v388
        %427 = vmatprep.subr.bf16.mxu0 %v391
        %428 = vmatpush1.bf16.msra.mxu0 %v390
        %429 = vmatprep.subr.bf16.mxu0 %v393
        %430 = vmatpush1.bf16.msra.mxu0 %v392
        %431 = vmatprep.subr.bf16.mxu0 %v395
        %432 = vmatpush1.bf16.msra.mxu0 %v394
        %433 = vmatprep.subr.bf16.mxu0 %v397
        %434 = vmatpush1.bf16.msra.mxu0 %v396
        %435 = vmatprep.subr.bf16.mxu0 %v399
        %436 = vmatpush1.bf16.msra.mxu0 %v398
        %437 = vmatprep.subr.bf16.mxu0 %v423
        %438 = vmatpush1.bf16.msra.mxu0 %v420
        %439 = vmatprep.subr.bf16.mxu0 0
        %440 = vmatpush1.bf16.msra.mxu0 0
        %441 = vmatprep.subr.bf16.mxu0 0
        %442 = vmatpush1.bf16.msra.mxu0 0
        %443 = vmatprep.subr.bf16.mxu0 0
        %444 = vmatpush1.bf16.msra.mxu0 0
        %445 = vmatprep.subr.bf16.mxu0 0
        %446 = vmatpush1.bf16.msra.mxu0 0
        %447 = vmatprep.subr.bf16.mxu0 0
        %448 = vmatpush1.bf16.msra.mxu0 0
        %449 = vmatprep.subr.bf16.mxu0 0
        %450 = vmatpush1.bf16.msra.mxu0 0
        %451 = vmatprep.subr.bf16.mxu0 0
        %452 = vmatpush1.bf16.msra.mxu0 0
        %453 = vmatprep.subr.bf16.mxu0 0
        %454 = vmatpush1.bf16.msra.mxu0 0
        %455 = vmatprep.subr.bf16.mxu0 0
        %456 = vmatpush1.bf16.msra.mxu0 0
        %457 = vmatprep.mubr.bf16.mxu0 0
        %458 = vmatmul.mubr.bf16.gmra.mrb[0].mxu0 %v416
        %v459 = vpop.f32.mrb[0].mxu0
        %v460 = vadd.f32 0.0, %v459
        %v461 = vpop.f32.mrb[0].mxu0
        %v462 = vadd.f32 0.0, %v461
        %v463 = vpop.f32.mrb[0].mxu0
        %v464 = vpop.f32.mrb[0].mxu0
        %465 = vdwg.mxu0
        %v468 = vrot.slane %v460, 2
        %v469 = vrot.slane %v462, 2
        %v472 = vmax.f32 %v460, %v468
        %v473 = vmax.f32 %v462, %v469
        %v476 = vrot.slane %v472, 4
        %v477 = vrot.slane %v473, 4
        %v480 = vmax.f32 %v472, %v476
        %v481 = vmax.f32 %v473, %v477
        %v482 = vld [vmem:[%s2] sm:$0x3]
        %484 = vset.pattern.permute.xlu0 0
        %485 = vperm.xlu0 %484, %v482
        %v486 = vpop.permute.xlu0 %485
        %v488 = vadd.f32 %v480, %v486
        %v489 = vadd.f32 %v481, %v486
        %v490 = vmax.f32 %v488, 0.0
        %v491 = vmax.f32 %v489, 0.0
        %v494 = vrot.slane %v490, 1
        %v495 = vrot.slane %v491, 1
        %496 = vrot.lane.b32.xlu0 %v494, 16
        %v497 = vpop.permute.xlu0 %496
        %498 = vrot.lane.b32.xlu0 %v495, 16
        %v499 = vpop.permute.xlu0 %498
        %vm500 = vcmask 130048
        %v501 = vsel %vm500, %v497, %v499
        %v504 = vsel %vm500, %v491, %v497
        %v505 = vpack.c.bf16 %v490, %v490
        %v506 = vpack.c.bf16 %v504, %v504
        %v507 = vpack.c.bf16 %v501, %v501
        %v508 = vld [vmem:[%s3] sm:$0xff]
        %v509 = vld [vmem:[%s3 + $0x8] sm:$0xff]
        %v510 = vld [vmem:[%s3 + $0x10] sm:$0xff]
        %v511 = vld [vmem:[%s3 + $0x18] sm:$0xff]
        %v512 = vld [vmem:[%s3 + $0x20] sm:$0xff]
        %v513 = vld [vmem:[%s3 + $0x28] sm:$0xff]
        %v514 = vld [vmem:[%s3 + $0x30] sm:$0xff]
        %v515 = vld [vmem:[%s3 + $0x38] sm:$0xff]
        %v516 = vld [vmem:[%s3 + $0x40] sm:$0xff]
        %v517 = vld [vmem:[%s3 + $0x48] sm:$0xff]
        %v518 = vld [vmem:[%s3 + $0x50] sm:$0xff]
        %v519 = vld [vmem:[%s3 + $0x58] sm:$0xff]
        %v520 = vld [vmem:[%s3 + $0x60] sm:$0xff]
        %v521 = vld [vmem:[%s3 + $0x68] sm:$0xff]
        %v522 = vld [vmem:[%s3 + $0x70] sm:$0xff]
        %v523 = vld [vmem:[%s3 + $0x78] sm:$0xff]
        %v524 = vld [vmem:[%s3 + $0x80] sm:$0xff]
        %v525 = vld [vmem:[%s3 + $0x88] sm:$0xff]
        %v526 = vld [vmem:[%s3 + $0x90] sm:$0xff]
        %v527 = vld [vmem:[%s3 + $0x98] sm:$0xff]
        %v528 = vld [vmem:[%s3 + $0xa0] sm:$0xff]
        %v529 = vld [vmem:[%s3 + $0xa8] sm:$0xff]
        %v530 = vld [vmem:[%s3 + $0xb0] sm:$0xff]
        %v531 = vld [vmem:[%s3 + $0xb8] sm:$0xff]
        %v532 = vld [vmem:[%s3 + $0xc0] sm:$0xff]
        %v533 = vld [vmem:[%s3 + $0xc8] sm:$0xff]
        %v534 = vld [vmem:[%s3 + $0xd0] sm:$0xff]
        %v535 = vld [vmem:[%s3 + $0xd8] sm:$0xff]
        %v536 = vld [vmem:[%s3 + $0xe0] sm:$0xff]
        %v537 = vld [vmem:[%s3 + $0xe8] sm:$0xff]
        %v538 = vld [vmem:[%s3 + $0xf0] sm:$0xff]
        %v539 = vld [vmem:[%s3 + $0xf8] sm:$0xff]
        %v540 = vld [vmem:[%s3 + $0x100] sm:$0xff]
        %v541 = vld [vmem:[%s3 + $0x108] sm:$0xff]
        %v542 = vld [vmem:[%s3 + $0x110] sm:$0xff]
        %v543 = vld [vmem:[%s3 + $0x118] sm:$0xff]
        %v544 = vld [vmem:[%s3 + $0x120] sm:$0xff]
        %v545 = vld [vmem:[%s3 + $0x128] sm:$0xff]
        %v546 = vld [vmem:[%s3 + $0x130] sm:$0xff]
        %v547 = vld [vmem:[%s3 + $0x138] sm:$0xff]
        %v548 = vld [vmem:[%s3 + $0x140] sm:$0xff]
        %v549 = vld [vmem:[%s3 + $0x148] sm:$0xff]
        %v550 = vld [vmem:[%s3 + $0x150] sm:$0xff]
        %v551 = vld [vmem:[%s3 + $0x158] sm:$0xff]
        %v552 = vld [vmem:[%s3 + $0x160] sm:$0xff]
        %v553 = vld [vmem:[%s3 + $0x168] sm:$0xff]
        %v554 = vld [vmem:[%s3 + $0x170] sm:$0xff]
        %v555 = vld [vmem:[%s3 + $0x178] sm:$0xff]
        %v556 = vld [vmem:[%s3 + $0x180] sm:$0xff]
        %v557 = vld [vmem:[%s3 + $0x188] sm:$0xff]
        %v558 = vld [vmem:[%s3 + $0x190] sm:$0xff]
        %v559 = vld [vmem:[%s3 + $0x198] sm:$0xff]
        %v560 = vld [vmem:[%s3 + $0x1a0] sm:$0xff]
        %v561 = vld [vmem:[%s3 + $0x1a8] sm:$0xff]
        %v562 = vld [vmem:[%s3 + $0x1b0] sm:$0xff]
        %v563 = vld [vmem:[%s3 + $0x1b8] sm:$0xff]
        %v564 = vld [vmem:[%s3 + $0x1c0] sm:$0xff]
        %v565 = vld [vmem:[%s3 + $0x1c8] sm:$0xff]
        %v566 = vld [vmem:[%s3 + $0x1d0] sm:$0xff]
        %v567 = vld [vmem:[%s3 + $0x1d8] sm:$0xff]
        %v568 = vld [vmem:[%s3 + $0x1e0] sm:$0xff]
        %v569 = vld [vmem:[%s3 + $0x1e8] sm:$0xff]
        %v570 = vld [vmem:[%s3 + $0x1f0] sm:$0xff]
        %v571 = vld [vmem:[%s3 + $0x1f8] sm:$0xff]
        %v572 = vld [vmem:[%s3 + $0x200] sm:$0xff]
        %v573 = vld [vmem:[%s3 + $0x208] sm:$0xff]
        %v574 = vld [vmem:[%s3 + $0x210] sm:$0xff]
        %v575 = vld [vmem:[%s3 + $0x218] sm:$0xff]
        %v576 = vld [vmem:[%s3 + $0x220] sm:$0xff]
        %v577 = vld [vmem:[%s3 + $0x228] sm:$0xff]
        %v578 = vld [vmem:[%s3 + $0x230] sm:$0xff]
        %v579 = vld [vmem:[%s3 + $0x238] sm:$0xff]
        %v580 = vld [vmem:[%s3 + $0x240] sm:$0xff]
        %v581 = vld [vmem:[%s3 + $0x248] sm:$0xff]
        %v582 = vld [vmem:[%s3 + $0x250] sm:$0xff]
        %v583 = vld [vmem:[%s3 + $0x258] sm:$0xff]
        %v584 = vld [vmem:[%s3 + $0x260] sm:$0xff]
        %v585 = vld [vmem:[%s3 + $0x268] sm:$0xff]
        %v586 = vld [vmem:[%s3 + $0x270] sm:$0xff]
        %v587 = vld [vmem:[%s3 + $0x278] sm:$0xff]
        %v588 = vld [vmem:[%s3 + $0x280] sm:$0xff]
        %v589 = vld [vmem:[%s3 + $0x288] sm:$0xff]
        %v590 = vld [vmem:[%s3 + $0x290] sm:$0xff]
        %v591 = vld [vmem:[%s3 + $0x298] sm:$0xff]
        %v592 = vld [vmem:[%s3 + $0x2a0] sm:$0xff]
        %v593 = vld [vmem:[%s3 + $0x2a8] sm:$0xff]
        %v594 = vld [vmem:[%s3 + $0x2b0] sm:$0xff]
        %v595 = vld [vmem:[%s3 + $0x2b8] sm:$0xff]
        %v596 = vld [vmem:[%s3 + $0x2c0] sm:$0xff]
        %v597 = vld [vmem:[%s3 + $0x2c8] sm:$0xff]
        %v598 = vld [vmem:[%s3 + $0x2d0] sm:$0xff]
        %v599 = vld [vmem:[%s3 + $0x2d8] sm:$0xff]
        %v600 = vld [vmem:[%s3 + $0x2e0] sm:$0xff]
        %v601 = vld [vmem:[%s3 + $0x2e8] sm:$0xff]
        %v602 = vld [vmem:[%s3 + $0x2f0] sm:$0xff]
        %v603 = vld [vmem:[%s3 + $0x2f8] sm:$0xff]
        %v604 = vld [vmem:[%s3 + $0x300] sm:$0xff]
        %v605 = vld [vmem:[%s3 + $0x308] sm:$0xff]
        %v606 = vld [vmem:[%s3 + $0x310] sm:$0xff]
        %v607 = vld [vmem:[%s3 + $0x318] sm:$0xff]
        %v608 = vld [vmem:[%s3 + $0x320] sm:$0xff]
        %v609 = vld [vmem:[%s3 + $0x328] sm:$0xff]
        %v610 = vld [vmem:[%s3 + $0x330] sm:$0xff]
        %v611 = vld [vmem:[%s3 + $0x338] sm:$0xff]
        %v612 = vld [vmem:[%s3 + $0x340] sm:$0xff]
        %v613 = vld [vmem:[%s3 + $0x348] sm:$0xff]
        %v614 = vld [vmem:[%s3 + $0x350] sm:$0xff]
        %v615 = vld [vmem:[%s3 + $0x358] sm:$0xff]
        %v616 = vld [vmem:[%s3 + $0x360] sm:$0xff]
        %v617 = vld [vmem:[%s3 + $0x368] sm:$0xff]
        %v618 = vld [vmem:[%s3 + $0x370] sm:$0xff]
        %v619 = vld [vmem:[%s3 + $0x378] sm:$0xff]
        %v620 = vld [vmem:[%s3 + $0x380] sm:$0xff]
        %v621 = vld [vmem:[%s3 + $0x388] sm:$0xff]
        %v622 = vld [vmem:[%s3 + $0x390] sm:$0xff]
        %v623 = vld [vmem:[%s3 + $0x398] sm:$0xff]
        %v624 = vld [vmem:[%s3 + $0x3a0] sm:$0xff]
        %v625 = vld [vmem:[%s3 + $0x3a8] sm:$0xff]
        %v626 = vld [vmem:[%s3 + $0x3b0] sm:$0xff]
        %v627 = vld [vmem:[%s3 + $0x3b8] sm:$0xff]
        %v628 = vld [vmem:[%s3 + $0x3c0] sm:$0xff]
        %v629 = vld [vmem:[%s3 + $0x3c8] sm:$0xff]
        %v630 = vld [vmem:[%s3 + $0x3d0] sm:$0xff]
        %v631 = vld [vmem:[%s3 + $0x3d8] sm:$0xff]
        %v632 = vld [vmem:[%s3 + $0x3e0] sm:$0xff]
        %v633 = vld [vmem:[%s3 + $0x3e8] sm:$0xff]
        %v634 = vld [vmem:[%s3 + $0x3f0] sm:$0xff]
        %v635 = vld [vmem:[%s3 + $0x3f8] sm:$0xff]
        %v636 = vld [vmem:[%s3 + $0x400] sm:$0xff]
        %v637 = vld [vmem:[%s3 + $0x408] sm:$0xff]
        %v638 = vld [vmem:[%s3 + $0x410] sm:$0xff]
        %v639 = vld [vmem:[%s3 + $0x418] sm:$0xff]
        %v640 = vld [vmem:[%s3 + $0x420] sm:$0xff]
        %v641 = vld [vmem:[%s3 + $0x428] sm:$0xff]
        %v642 = vld [vmem:[%s3 + $0x430] sm:$0xff]
        %v643 = vld [vmem:[%s3 + $0x438] sm:$0xff]
        %v644 = vld [vmem:[%s3 + $0x440] sm:$0xff]
        %v645 = vld [vmem:[%s3 + $0x448] sm:$0xff]
        %v646 = vld [vmem:[%s3 + $0x450] sm:$0xff]
        %v647 = vld [vmem:[%s3 + $0x458] sm:$0xff]
        %v648 = vld [vmem:[%s3 + $0x460] sm:$0xff]
        %v649 = vld [vmem:[%s3 + $0x468] sm:$0xff]
        %v650 = vld [vmem:[%s3 + $0x470] sm:$0xff]
        %v651 = vld [vmem:[%s3 + $0x478] sm:$0xff]
        %v796 = vunpack.c.l.b16 %v508
        %v797 = vunpack.c.h.b16 %v508
        %v798 = vunpack.c.l.b16 %v509
        %v799 = vunpack.c.h.b16 %v509
        %v800 = vunpack.c.l.b16 %v510
        %v801 = vunpack.c.h.b16 %v510
        %v802 = vunpack.c.l.b16 %v511
        %v803 = vunpack.c.h.b16 %v511
        %v804 = vunpack.c.l.b16 %v512
        %v805 = vunpack.c.h.b16 %v512
        %v806 = vunpack.c.l.b16 %v513
        %v807 = vunpack.c.h.b16 %v513
        %v808 = vunpack.c.l.b16 %v514
        %v809 = vunpack.c.h.b16 %v514
        %v810 = vunpack.c.l.b16 %v515
        %v811 = vunpack.c.h.b16 %v515
        %v812 = vunpack.c.l.b16 %v516
        %v813 = vunpack.c.h.b16 %v516
        %v814 = vunpack.c.l.b16 %v517
        %v815 = vunpack.c.h.b16 %v517
        %v816 = vunpack.c.l.b16 %v518
        %v817 = vunpack.c.h.b16 %v518
        %v818 = vunpack.c.l.b16 %v519
        %v819 = vunpack.c.h.b16 %v519
        %v820 = vunpack.c.l.b16 %v520
        %v821 = vunpack.c.h.b16 %v520
        %v822 = vunpack.c.l.b16 %v521
        %v823 = vunpack.c.h.b16 %v521
        %v824 = vunpack.c.l.b16 %v522
        %v825 = vunpack.c.h.b16 %v522
        %v826 = vunpack.c.l.b16 %v523
        %v827 = vunpack.c.h.b16 %v523
        %v828 = vunpack.c.l.b16 %v524
        %v829 = vunpack.c.h.b16 %v524
        %v830 = vunpack.c.l.b16 %v525
        %v831 = vunpack.c.h.b16 %v525
        %v832 = vunpack.c.l.b16 %v526
        %v833 = vunpack.c.h.b16 %v526
        %v834 = vunpack.c.l.b16 %v527
        %v835 = vunpack.c.h.b16 %v527
        %v836 = vunpack.c.l.b16 %v528
        %v837 = vunpack.c.h.b16 %v528
        %v838 = vunpack.c.l.b16 %v529
        %v839 = vunpack.c.h.b16 %v529
        %v840 = vunpack.c.l.b16 %v530
        %v841 = vunpack.c.h.b16 %v530
        %v842 = vunpack.c.l.b16 %v531
        %v843 = vunpack.c.h.b16 %v531
        %v844 = vunpack.c.l.b16 %v532
        %v845 = vunpack.c.h.b16 %v532
        %v846 = vunpack.c.l.b16 %v533
        %v847 = vunpack.c.h.b16 %v533
        %v848 = vunpack.c.l.b16 %v534
        %v849 = vunpack.c.h.b16 %v534
        %v850 = vunpack.c.l.b16 %v535
        %v851 = vunpack.c.h.b16 %v535
        %v852 = vunpack.c.l.b16 %v536
        %v853 = vunpack.c.h.b16 %v536
        %v854 = vunpack.c.l.b16 %v537
        %v855 = vunpack.c.h.b16 %v537
        %v856 = vunpack.c.l.b16 %v538
        %v857 = vunpack.c.h.b16 %v538
        %v858 = vunpack.c.l.b16 %v539
        %v859 = vunpack.c.h.b16 %v539
        %v860 = vunpack.c.l.b16 %v540
        %v861 = vunpack.c.h.b16 %v540
        %v862 = vunpack.c.l.b16 %v541
        %v863 = vunpack.c.h.b16 %v541
        %v864 = vunpack.c.l.b16 %v542
        %v865 = vunpack.c.h.b16 %v542
        %v866 = vunpack.c.l.b16 %v543
        %v867 = vunpack.c.h.b16 %v543
        %v868 = vunpack.c.l.b16 %v544
        %v869 = vunpack.c.h.b16 %v544
        %v870 = vunpack.c.l.b16 %v545
        %v871 = vunpack.c.h.b16 %v545
        %v872 = vunpack.c.l.b16 %v546
        %v873 = vunpack.c.h.b16 %v546
        %v874 = vunpack.c.l.b16 %v547
        %v875 = vunpack.c.h.b16 %v547
        %v876 = vunpack.c.l.b16 %v548
        %v877 = vunpack.c.h.b16 %v548
        %v878 = vunpack.c.l.b16 %v549
        %v879 = vunpack.c.h.b16 %v549
        %v880 = vunpack.c.l.b16 %v550
        %v881 = vunpack.c.h.b16 %v550
        %v882 = vunpack.c.l.b16 %v551
        %v883 = vunpack.c.h.b16 %v551
        %v884 = vunpack.c.l.b16 %v552
        %v885 = vunpack.c.h.b16 %v552
        %v886 = vunpack.c.l.b16 %v553
        %v887 = vunpack.c.h.b16 %v553
        %v888 = vunpack.c.l.b16 %v554
        %v889 = vunpack.c.h.b16 %v554
        %v890 = vunpack.c.l.b16 %v555
        %v891 = vunpack.c.h.b16 %v555
        %v892 = vunpack.c.l.b16 %v556
        %v893 = vunpack.c.h.b16 %v556
        %v894 = vunpack.c.l.b16 %v557
        %v895 = vunpack.c.h.b16 %v557
        %v896 = vunpack.c.l.b16 %v558
        %v897 = vunpack.c.h.b16 %v558
        %v898 = vunpack.c.l.b16 %v559
        %v899 = vunpack.c.h.b16 %v559
        %v900 = vunpack.c.l.b16 %v560
        %v901 = vunpack.c.h.b16 %v560
        %v902 = vunpack.c.l.b16 %v561
        %v903 = vunpack.c.h.b16 %v561
        %v904 = vunpack.c.l.b16 %v562
        %v905 = vunpack.c.h.b16 %v562
        %v906 = vunpack.c.l.b16 %v563
        %v907 = vunpack.c.h.b16 %v563
        %v908 = vunpack.c.l.b16 %v564
        %v909 = vunpack.c.h.b16 %v564
        %v910 = vunpack.c.l.b16 %v565
        %v911 = vunpack.c.h.b16 %v565
        %v912 = vunpack.c.l.b16 %v566
        %v913 = vunpack.c.h.b16 %v566
        %v914 = vunpack.c.l.b16 %v567
        %v915 = vunpack.c.h.b16 %v567
        %v916 = vunpack.c.l.b16 %v568
        %v917 = vunpack.c.h.b16 %v568
        %v918 = vunpack.c.l.b16 %v569
        %v919 = vunpack.c.h.b16 %v569
        %v920 = vunpack.c.l.b16 %v570
        %v921 = vunpack.c.h.b16 %v570
        %v922 = vunpack.c.l.b16 %v571
        %v923 = vunpack.c.h.b16 %v571
        %v924 = vunpack.c.l.b16 %v572
        %v925 = vunpack.c.h.b16 %v572
        %v926 = vunpack.c.l.b16 %v573
        %v927 = vunpack.c.h.b16 %v573
        %v928 = vunpack.c.l.b16 %v574
        %v929 = vunpack.c.h.b16 %v574
        %v930 = vunpack.c.l.b16 %v575
        %v931 = vunpack.c.h.b16 %v575
        %v932 = vunpack.c.l.b16 %v576
        %v933 = vunpack.c.h.b16 %v576
        %v934 = vunpack.c.l.b16 %v577
        %v935 = vunpack.c.h.b16 %v577
        %v936 = vunpack.c.l.b16 %v578
        %v937 = vunpack.c.h.b16 %v578
        %v938 = vunpack.c.l.b16 %v579
        %v939 = vunpack.c.h.b16 %v579
        %v940 = vunpack.c.l.b16 %v580
        %v941 = vunpack.c.h.b16 %v580
        %v942 = vunpack.c.l.b16 %v581
        %v943 = vunpack.c.h.b16 %v581
        %v944 = vunpack.c.l.b16 %v582
        %v945 = vunpack.c.h.b16 %v582
        %v946 = vunpack.c.l.b16 %v583
        %v947 = vunpack.c.h.b16 %v583
        %v948 = vunpack.c.l.b16 %v584
        %v949 = vunpack.c.h.b16 %v584
        %v950 = vunpack.c.l.b16 %v585
        %v951 = vunpack.c.h.b16 %v585
        %v952 = vunpack.c.l.b16 %v586
        %v953 = vunpack.c.h.b16 %v586
        %v954 = vunpack.c.l.b16 %v587
        %v955 = vunpack.c.h.b16 %v587
        %v956 = vunpack.c.l.b16 %v588
        %v957 = vunpack.c.h.b16 %v588
        %v958 = vunpack.c.l.b16 %v589
        %v959 = vunpack.c.h.b16 %v589
        %v960 = vunpack.c.l.b16 %v590
        %v961 = vunpack.c.h.b16 %v590
        %v962 = vunpack.c.l.b16 %v591
        %v963 = vunpack.c.h.b16 %v591
        %v964 = vunpack.c.l.b16 %v592
        %v965 = vunpack.c.h.b16 %v592
        %v966 = vunpack.c.l.b16 %v593
        %v967 = vunpack.c.h.b16 %v593
        %v968 = vunpack.c.l.b16 %v594
        %v969 = vunpack.c.h.b16 %v594
        %v970 = vunpack.c.l.b16 %v595
        %v971 = vunpack.c.h.b16 %v595
        %v972 = vunpack.c.l.b16 %v596
        %v973 = vunpack.c.h.b16 %v596
        %v974 = vunpack.c.l.b16 %v597
        %v975 = vunpack.c.h.b16 %v597
        %v976 = vunpack.c.l.b16 %v598
        %v977 = vunpack.c.h.b16 %v598
        %v978 = vunpack.c.l.b16 %v599
        %v979 = vunpack.c.h.b16 %v599
        %v980 = vunpack.c.l.b16 %v600
        %v981 = vunpack.c.h.b16 %v600
        %v982 = vunpack.c.l.b16 %v601
        %v983 = vunpack.c.h.b16 %v601
        %v984 = vunpack.c.l.b16 %v602
        %v985 = vunpack.c.h.b16 %v602
        %v986 = vunpack.c.l.b16 %v603
        %v987 = vunpack.c.h.b16 %v603
        %v988 = vunpack.c.l.b16 %v604
        %v989 = vunpack.c.h.b16 %v604
        %v990 = vunpack.c.l.b16 %v605
        %v991 = vunpack.c.h.b16 %v605
        %v992 = vunpack.c.l.b16 %v606
        %v993 = vunpack.c.h.b16 %v606
        %v994 = vunpack.c.l.b16 %v607
        %v995 = vunpack.c.h.b16 %v607
        %v996 = vunpack.c.l.b16 %v608
        %v997 = vunpack.c.h.b16 %v608
        %v998 = vunpack.c.l.b16 %v609
        %v999 = vunpack.c.h.b16 %v609
        %v1000 = vunpack.c.l.b16 %v610
        %v1001 = vunpack.c.h.b16 %v610
        %v1002 = vunpack.c.l.b16 %v611
        %v1003 = vunpack.c.h.b16 %v611
        %v1004 = vunpack.c.l.b16 %v612
        %v1005 = vunpack.c.h.b16 %v612
        %v1006 = vunpack.c.l.b16 %v613
        %v1007 = vunpack.c.h.b16 %v613
        %v1008 = vunpack.c.l.b16 %v614
        %v1009 = vunpack.c.h.b16 %v614
        %v1010 = vunpack.c.l.b16 %v615
        %v1011 = vunpack.c.h.b16 %v615
        %v1012 = vunpack.c.l.b16 %v616
        %v1013 = vunpack.c.h.b16 %v616
        %v1014 = vunpack.c.l.b16 %v617
        %v1015 = vunpack.c.h.b16 %v617
        %v1016 = vunpack.c.l.b16 %v618
        %v1017 = vunpack.c.h.b16 %v618
        %v1018 = vunpack.c.l.b16 %v619
        %v1019 = vunpack.c.h.b16 %v619
        %v1020 = vunpack.c.l.b16 %v620
        %v1021 = vunpack.c.h.b16 %v620
        %v1022 = vunpack.c.l.b16 %v621
        %v1023 = vunpack.c.h.b16 %v621
        %v1024 = vunpack.c.l.b16 %v622
        %v1025 = vunpack.c.h.b16 %v622
        %v1026 = vunpack.c.l.b16 %v623
        %v1027 = vunpack.c.h.b16 %v623
        %v1028 = vunpack.c.l.b16 %v624
        %v1029 = vunpack.c.h.b16 %v624
        %v1030 = vunpack.c.l.b16 %v625
        %v1031 = vunpack.c.h.b16 %v625
        %v1032 = vunpack.c.l.b16 %v626
        %v1033 = vunpack.c.h.b16 %v626
        %v1034 = vunpack.c.l.b16 %v627
        %v1035 = vunpack.c.h.b16 %v627
        %v1036 = vunpack.c.l.b16 %v628
        %v1037 = vunpack.c.h.b16 %v628
        %v1038 = vunpack.c.l.b16 %v629
        %v1039 = vunpack.c.h.b16 %v629
        %v1040 = vunpack.c.l.b16 %v630
        %v1041 = vunpack.c.h.b16 %v630
        %v1042 = vunpack.c.l.b16 %v631
        %v1043 = vunpack.c.h.b16 %v631
        %v1044 = vunpack.c.l.b16 %v632
        %v1045 = vunpack.c.h.b16 %v632
        %v1046 = vunpack.c.l.b16 %v633
        %v1047 = vunpack.c.h.b16 %v633
        %v1048 = vunpack.c.l.b16 %v634
        %v1049 = vunpack.c.h.b16 %v634
        %v1050 = vunpack.c.l.b16 %v635
        %v1051 = vunpack.c.h.b16 %v635
        %v1052 = vunpack.c.l.b16 %v636
        %v1053 = vunpack.c.h.b16 %v636
        %v1054 = vunpack.c.l.b16 %v637
        %v1055 = vunpack.c.h.b16 %v637
        %v1056 = vunpack.c.l.b16 %v638
        %v1057 = vunpack.c.h.b16 %v638
        %v1058 = vunpack.c.l.b16 %v639
        %v1059 = vunpack.c.h.b16 %v639
        %v1060 = vunpack.c.l.b16 %v640
        %v1061 = vunpack.c.h.b16 %v640
        %v1062 = vunpack.c.l.b16 %v641
        %v1063 = vunpack.c.h.b16 %v641
        %v1064 = vunpack.c.l.b16 %v642
        %v1065 = vunpack.c.h.b16 %v642
        %v1066 = vunpack.c.l.b16 %v643
        %v1067 = vunpack.c.h.b16 %v643
        %v1068 = vunpack.c.l.b16 %v644
        %v1069 = vunpack.c.h.b16 %v644
        %v1070 = vunpack.c.l.b16 %v645
        %v1071 = vunpack.c.h.b16 %v645
        %v1072 = vunpack.c.l.b16 %v646
        %v1073 = vunpack.c.h.b16 %v646
        %v1074 = vunpack.c.l.b16 %v647
        %v1075 = vunpack.c.h.b16 %v647
        %v1076 = vunpack.c.l.b16 %v648
        %v1077 = vunpack.c.h.b16 %v648
        %v1078 = vunpack.c.l.b16 %v649
        %v1079 = vunpack.c.h.b16 %v649
        %v1080 = vunpack.c.l.b16 %v650
        %v1081 = vunpack.c.h.b16 %v650
        %v1082 = vunpack.c.l.b16 %v651
        %v1083 = vunpack.c.h.b16 %v651
        %v1084 = vpack.c.b16 %v804, %v796
        %v1085 = vpack.c.b16 %v805, %v797
        %v1086 = vpack.c.b16 %v806, %v798
        %v1087 = vpack.c.b16 %v807, %v799
        %v1088 = vpack.c.b16 %v808, %v800
        %v1089 = vpack.c.b16 %v809, %v801
        %v1090 = vpack.c.b16 %v810, %v802
        %v1091 = vpack.c.b16 %v811, %v803
        %v1092 = vpack.c.b16 %v820, %v812
        %v1093 = vpack.c.b16 %v821, %v813
        %v1094 = vpack.c.b16 %v822, %v814
        %v1095 = vpack.c.b16 %v823, %v815
        %v1096 = vpack.c.b16 %v824, %v816
        %v1097 = vpack.c.b16 %v825, %v817
        %v1098 = vpack.c.b16 %v826, %v818
        %v1099 = vpack.c.b16 %v827, %v819
        %v1100 = vpack.c.b16 %v836, %v828
        %v1101 = vpack.c.b16 %v837, %v829
        %v1102 = vpack.c.b16 %v838, %v830
        %v1103 = vpack.c.b16 %v839, %v831
        %v1104 = vpack.c.b16 %v840, %v832
        %v1105 = vpack.c.b16 %v841, %v833
        %v1106 = vpack.c.b16 %v842, %v834
        %v1107 = vpack.c.b16 %v843, %v835
        %v1108 = vpack.c.b16 %v852, %v844
        %v1109 = vpack.c.b16 %v853, %v845
        %v1110 = vpack.c.b16 %v854, %v846
        %v1111 = vpack.c.b16 %v855, %v847
        %v1112 = vpack.c.b16 %v856, %v848
        %v1113 = vpack.c.b16 %v857, %v849
        %v1114 = vpack.c.b16 %v858, %v850
        %v1115 = vpack.c.b16 %v859, %v851
        %v1116 = vpack.c.b16 %v868, %v860
        %v1117 = vpack.c.b16 %v869, %v861
        %v1118 = vpack.c.b16 %v870, %v862
        %v1119 = vpack.c.b16 %v871, %v863
        %v1120 = vpack.c.b16 %v872, %v864
        %v1121 = vpack.c.b16 %v873, %v865
        %v1122 = vpack.c.b16 %v874, %v866
        %v1123 = vpack.c.b16 %v875, %v867
        %v1124 = vpack.c.b16 %v884, %v876
        %v1125 = vpack.c.b16 %v885, %v877
        %v1126 = vpack.c.b16 %v886, %v878
        %v1127 = vpack.c.b16 %v887, %v879
        %v1128 = vpack.c.b16 %v888, %v880
        %v1129 = vpack.c.b16 %v889, %v881
        %v1130 = vpack.c.b16 %v890, %v882
        %v1131 = vpack.c.b16 %v891, %v883
        %v1132 = vpack.c.b16 %v900, %v892
        %v1133 = vpack.c.b16 %v901, %v893
        %v1134 = vpack.c.b16 %v902, %v894
        %v1135 = vpack.c.b16 %v903, %v895
        %v1136 = vpack.c.b16 %v904, %v896
        %v1137 = vpack.c.b16 %v905, %v897
        %v1138 = vpack.c.b16 %v906, %v898
        %v1139 = vpack.c.b16 %v907, %v899
        %v1140 = vpack.c.b16 %v916, %v908
        %v1141 = vpack.c.b16 %v917, %v909
        %v1142 = vpack.c.b16 %v918, %v910
        %v1143 = vpack.c.b16 %v919, %v911
        %v1144 = vpack.c.b16 %v920, %v912
        %v1145 = vpack.c.b16 %v921, %v913
        %v1146 = vpack.c.b16 %v922, %v914
        %v1147 = vpack.c.b16 %v923, %v915
        %v1148 = vpack.c.b16 %v932, %v924
        %v1149 = vpack.c.b16 %v933, %v925
        %v1150 = vpack.c.b16 %v934, %v926
        %v1151 = vpack.c.b16 %v935, %v927
        %v1152 = vpack.c.b16 %v936, %v928
        %v1153 = vpack.c.b16 %v937, %v929
        %v1154 = vpack.c.b16 %v938, %v930
        %v1155 = vpack.c.b16 %v939, %v931
        %v1156 = vpack.c.b16 %v948, %v940
        %v1157 = vpack.c.b16 %v949, %v941
        %v1158 = vpack.c.b16 %v950, %v942
        %v1159 = vpack.c.b16 %v951, %v943
        %v1160 = vpack.c.b16 %v952, %v944
        %v1161 = vpack.c.b16 %v953, %v945
        %v1162 = vpack.c.b16 %v954, %v946
        %v1163 = vpack.c.b16 %v955, %v947
        %v1164 = vpack.c.b16 %v964, %v956
        %v1165 = vpack.c.b16 %v965, %v957
        %v1166 = vpack.c.b16 %v966, %v958
        %v1167 = vpack.c.b16 %v967, %v959
        %v1168 = vpack.c.b16 %v968, %v960
        %v1169 = vpack.c.b16 %v969, %v961
        %v1170 = vpack.c.b16 %v970, %v962
        %v1171 = vpack.c.b16 %v971, %v963
        %v1172 = vpack.c.b16 %v980, %v972
        %v1173 = vpack.c.b16 %v981, %v973
        %v1174 = vpack.c.b16 %v982, %v974
        %v1175 = vpack.c.b16 %v983, %v975
        %v1176 = vpack.c.b16 %v984, %v976
        %v1177 = vpack.c.b16 %v985, %v977
        %v1178 = vpack.c.b16 %v986, %v978
        %v1179 = vpack.c.b16 %v987, %v979
        %v1180 = vpack.c.b16 %v996, %v988
        %v1181 = vpack.c.b16 %v997, %v989
        %v1182 = vpack.c.b16 %v998, %v990
        %v1183 = vpack.c.b16 %v999, %v991
        %v1184 = vpack.c.b16 %v1000, %v992
        %v1185 = vpack.c.b16 %v1001, %v993
        %v1186 = vpack.c.b16 %v1002, %v994
        %v1187 = vpack.c.b16 %v1003, %v995
        %v1188 = vpack.c.b16 %v1012, %v1004
        %v1189 = vpack.c.b16 %v1013, %v1005
        %v1190 = vpack.c.b16 %v1014, %v1006
        %v1191 = vpack.c.b16 %v1015, %v1007
        %v1192 = vpack.c.b16 %v1016, %v1008
        %v1193 = vpack.c.b16 %v1017, %v1009
        %v1194 = vpack.c.b16 %v1018, %v1010
        %v1195 = vpack.c.b16 %v1019, %v1011
        %v1196 = vpack.c.b16 %v1028, %v1020
        %v1197 = vpack.c.b16 %v1029, %v1021
        %v1198 = vpack.c.b16 %v1030, %v1022
        %v1199 = vpack.c.b16 %v1031, %v1023
        %v1200 = vpack.c.b16 %v1032, %v1024
        %v1201 = vpack.c.b16 %v1033, %v1025
        %v1202 = vpack.c.b16 %v1034, %v1026
        %v1203 = vpack.c.b16 %v1035, %v1027
        %v1204 = vpack.c.b16 %v1044, %v1036
        %v1205 = vpack.c.b16 %v1045, %v1037
        %v1206 = vpack.c.b16 %v1046, %v1038
        %v1207 = vpack.c.b16 %v1047, %v1039
        %v1208 = vpack.c.b16 %v1048, %v1040
        %v1209 = vpack.c.b16 %v1049, %v1041
        %v1210 = vpack.c.b16 %v1050, %v1042
        %v1211 = vpack.c.b16 %v1051, %v1043
        %v1212 = vpack.c.b16 %v1060, %v1052
        %v1213 = vpack.c.b16 %v1061, %v1053
        %v1214 = vpack.c.b16 %v1062, %v1054
        %v1215 = vpack.c.b16 %v1063, %v1055
        %v1216 = vpack.c.b16 %v1064, %v1056
        %v1217 = vpack.c.b16 %v1065, %v1057
        %v1218 = vpack.c.b16 %v1066, %v1058
        %v1219 = vpack.c.b16 %v1067, %v1059
        %v1220 = vpack.c.b16 %v1076, %v1068
        %v1221 = vpack.c.b16 %v1077, %v1069
        %v1222 = vpack.c.b16 %v1078, %v1070
        %v1223 = vpack.c.b16 %v1079, %v1071
        %v1224 = vpack.c.b16 %v1080, %v1072
        %v1225 = vpack.c.b16 %v1081, %v1073
        %v1226 = vpack.c.b16 %v1082, %v1074
        %v1227 = vpack.c.b16 %v1083, %v1075
        %vm1372 = vcmask 261120
        %v1374 = vsel %vm1372, %v507, 0
        %1376 = vmatprep.subr.bf16.mxu0 %v1085
        %1377 = vmatpush1.bf16.msra.mxu0 %v1084
        %1378 = vmatprep.subr.bf16.mxu0 %v1093
        %1379 = vmatpush1.bf16.msra.mxu0 %v1092
        %1380 = vmatprep.subr.bf16.mxu0 %v1101
        %1381 = vmatpush1.bf16.msra.mxu0 %v1100
        %1382 = vmatprep.subr.bf16.mxu0 %v1109
        %1383 = vmatpush1.bf16.msra.mxu0 %v1108
        %1384 = vmatprep.subr.bf16.mxu0 %v1117
        %1385 = vmatpush1.bf16.msra.mxu0 %v1116
        %1386 = vmatprep.subr.bf16.mxu0 %v1125
        %1387 = vmatpush1.bf16.msra.mxu0 %v1124
        %1388 = vmatprep.subr.bf16.mxu0 %v1133
        %1389 = vmatpush1.bf16.msra.mxu0 %v1132
        %1390 = vmatprep.subr.bf16.mxu0 %v1141
        %1391 = vmatpush1.bf16.msra.mxu0 %v1140
        %1392 = vmatprep.subr.bf16.mxu0 %v1149
        %1393 = vmatpush1.bf16.msra.mxu0 %v1148
        %1394 = vmatprep.subr.bf16.mxu0 %v1157
        %1395 = vmatpush1.bf16.msra.mxu0 %v1156
        %1396 = vmatprep.subr.bf16.mxu0 %v1165
        %1397 = vmatpush1.bf16.msra.mxu0 %v1164
        %1398 = vmatprep.subr.bf16.mxu0 %v1173
        %1399 = vmatpush1.bf16.msra.mxu0 %v1172
        %1400 = vmatprep.subr.bf16.mxu0 %v1181
        %1401 = vmatpush1.bf16.msra.mxu0 %v1180
        %1402 = vmatprep.subr.bf16.mxu0 %v1189
        %1403 = vmatpush1.bf16.msra.mxu0 %v1188
        %1404 = vmatprep.subr.bf16.mxu0 %v1197
        %1405 = vmatpush1.bf16.msra.mxu0 %v1196
        %1406 = vmatprep.subr.bf16.mxu0 %v1205
        %1407 = vmatpush1.bf16.msra.mxu0 %v1204
        %1408 = vmatprep.mubr.bf16.mxu0 %v506
        %1409 = vmatmul.mubr.bf16.gmra.mrb[0].mxu0 %v505
        %v1410 = vpop.f32.mrb[0].mxu0
        %v1411 = vadd.f32 0.0, %v1410
        %v1412 = vpop.f32.mrb[0].mxu0
        %v1413 = vadd.f32 0.0, %v1412
        %v1414 = vpop.f32.mrb[0].mxu0
        %v1415 = vpop.f32.mrb[0].mxu0
        %1416 = vdwg.mxu0
        %1417 = vmatprep.subr.bf16.mxu0 %v1213
        %1418 = vmatpush1.bf16.msra.mxu0 %v1212
        %1419 = vmatprep.subr.bf16.mxu0 %v1221
        %1420 = vmatpush1.bf16.msra.mxu0 %v1220
        %1421 = vmatprep.subr.bf16.mxu0 0
        %1422 = vmatpush1.bf16.msra.mxu0 0
        %1423 = vmatprep.subr.bf16.mxu0 0
        %1424 = vmatpush1.bf16.msra.mxu0 0
        %1425 = vmatprep.subr.bf16.mxu0 0
        %1426 = vmatpush1.bf16.msra.mxu0 0
        %1427 = vmatprep.subr.bf16.mxu0 0
        %1428 = vmatpush1.bf16.msra.mxu0 0
        %1429 = vmatprep.subr.bf16.mxu0 0
        %1430 = vmatpush1.bf16.msra.mxu0 0
        %1431 = vmatprep.subr.bf16.mxu0 0
        %1432 = vmatpush1.bf16.msra.mxu0 0
        %1433 = vmatprep.subr.bf16.mxu0 0
        %1434 = vmatpush1.bf16.msra.mxu0 0
        %1435 = vmatprep.subr.bf16.mxu0 0
        %1436 = vmatpush1.bf16.msra.mxu0 0
        %1437 = vmatprep.subr.bf16.mxu0 0
        %1438 = vmatpush1.bf16.msra.mxu0 0
        %1439 = vmatprep.subr.bf16.mxu0 0
        %1440 = vmatpush1.bf16.msra.mxu0 0
        %1441 = vmatprep.subr.bf16.mxu0 0
        %1442 = vmatpush1.bf16.msra.mxu0 0
        %1443 = vmatprep.subr.bf16.mxu0 0
        %1444 = vmatpush1.bf16.msra.mxu0 0
        %1445 = vmatprep.subr.bf16.mxu0 0
        %1446 = vmatpush1.bf16.msra.mxu0 0
        %1447 = vmatprep.subr.bf16.mxu0 0
        %1448 = vmatpush1.bf16.msra.mxu0 0
        %1449 = vmatprep.mubr.bf16.mxu0 0
        %1450 = vmatmul.mubr.bf16.gmra.mrb[0].mxu0 %v1374
        %v1451 = vpop.f32.mrb[0].mxu0
        %v1452 = vadd.f32 %v1411, %v1451
        %v1453 = vpop.f32.mrb[0].mxu0
        %v1454 = vadd.f32 %v1413, %v1453
        %v1455 = vpop.f32.mrb[0].mxu0
        %v1456 = vpop.f32.mrb[0].mxu0
        %1457 = vdwg.mxu0
        %1458 = vmatprep.subr.bf16.mxu0 %v1087
        %1459 = vmatpush1.bf16.msra.mxu0 %v1086
        %1460 = vmatprep.subr.bf16.mxu0 %v1095
        %1461 = vmatpush1.bf16.msra.mxu0 %v1094
        %1462 = vmatprep.subr.bf16.mxu0 %v1103
        %1463 = vmatpush1.bf16.msra.mxu0 %v1102
        %1464 = vmatprep.subr.bf16.mxu0 %v1111
        %1465 = vmatpush1.bf16.msra.mxu0 %v1110
        %1466 = vmatprep.subr.bf16.mxu0 %v1119
        %1467 = vmatpush1.bf16.msra.mxu0 %v1118
        %1468 = vmatprep.subr.bf16.mxu0 %v1127
        %1469 = vmatpush1.bf16.msra.mxu0 %v1126
        %1470 = vmatprep.subr.bf16.mxu0 %v1135
        %1471 = vmatpush1.bf16.msra.mxu0 %v1134
        %1472 = vmatprep.subr.bf16.mxu0 %v1143
        %1473 = vmatpush1.bf16.msra.mxu0 %v1142
        %1474 = vmatprep.subr.bf16.mxu0 %v1151
        %1475 = vmatpush1.bf16.msra.mxu0 %v1150
        %1476 = vmatprep.subr.bf16.mxu0 %v1159
        %1477 = vmatpush1.bf16.msra.mxu0 %v1158
        %1478 = vmatprep.subr.bf16.mxu0 %v1167
        %1479 = vmatpush1.bf16.msra.mxu0 %v1166
        %1480 = vmatprep.subr.bf16.mxu0 %v1175
        %1481 = vmatpush1.bf16.msra.mxu0 %v1174
        %1482 = vmatprep.subr.bf16.mxu0 %v1183
        %1483 = vmatpush1.bf16.msra.mxu0 %v1182
        %1484 = vmatprep.subr.bf16.mxu0 %v1191
        %1485 = vmatpush1.bf16.msra.mxu0 %v1190
        %1486 = vmatprep.subr.bf16.mxu0 %v1199
        %1487 = vmatpush1.bf16.msra.mxu0 %v1198
        %1488 = vmatprep.subr.bf16.mxu0 %v1207
        %1489 = vmatpush1.bf16.msra.mxu0 %v1206
        %1490 = vmatprep.mubr.bf16.mxu0 %v506
        %1491 = vmatmul.mubr.bf16.gmra.mrb[0].mxu0 %v505
        %v1492 = vpop.f32.mrb[0].mxu0
        %v1493 = vadd.f32 0.0, %v1492
        %v1494 = vpop.f32.mrb[0].mxu0
        %v1495 = vadd.f32 0.0, %v1494
        %v1496 = vpop.f32.mrb[0].mxu0
        %v1497 = vpop.f32.mrb[0].mxu0
        %1498 = vdwg.mxu0
        %1499 = vmatprep.subr.bf16.mxu0 %v1215
        %1500 = vmatpush1.bf16.msra.mxu0 %v1214
        %1501 = vmatprep.subr.bf16.mxu0 %v1223
        %1502 = vmatpush1.bf16.msra.mxu0 %v1222
        %1503 = vmatprep.subr.bf16.mxu0 0
        %1504 = vmatpush1.bf16.msra.mxu0 0
        %1505 = vmatprep.subr.bf16.mxu0 0
        %1506 = vmatpush1.bf16.msra.mxu0 0
        %1507 = vmatprep.subr.bf16.mxu0 0
        %1508 = vmatpush1.bf16.msra.mxu0 0
        %1509 = vmatprep.subr.bf16.mxu0 0
        %1510 = vmatpush1.bf16.msra.mxu0 0
        %1511 = vmatprep.subr.bf16.mxu0 0
        %1512 = vmatpush1.bf16.msra.mxu0 0
        %1513 = vmatprep.subr.bf16.mxu0 0
        %1514 = vmatpush1.bf16.msra.mxu0 0
        %1515 = vmatprep.subr.bf16.mxu0 0
        %1516 = vmatpush1.bf16.msra.mxu0 0
        %1517 = vmatprep.subr.bf16.mxu0 0
        %1518 = vmatpush1.bf16.msra.mxu0 0
        %1519 = vmatprep.subr.bf16.mxu0 0
        %1520 = vmatpush1.bf16.msra.mxu0 0
        %1521 = vmatprep.subr.bf16.mxu0 0
        %1522 = vmatpush1.bf16.msra.mxu0 0
        %1523 = vmatprep.subr.bf16.mxu0 0
        %1524 = vmatpush1.bf16.msra.mxu0 0
        %1525 = vmatprep.subr.bf16.mxu0 0
        %1526 = vmatpush1.bf16.msra.mxu0 0
        %1527 = vmatprep.subr.bf16.mxu0 0
        %1528 = vmatpush1.bf16.msra.mxu0 0
        %1529 = vmatprep.subr.bf16.mxu0 0
        %1530 = vmatpush1.bf16.msra.mxu0 0
        %1531 = vmatprep.mubr.bf16.mxu0 0
        %1532 = vmatmul.mubr.bf16.gmra.mrb[0].mxu0 %v1374
        %v1533 = vpop.f32.mrb[0].mxu0
        %v1534 = vadd.f32 %v1493, %v1533
        %v1535 = vpop.f32.mrb[0].mxu0
        %v1536 = vadd.f32 %v1495, %v1535
        %v1537 = vpop.f32.mrb[0].mxu0
        %v1538 = vpop.f32.mrb[0].mxu0
        %1539 = vdwg.mxu0
        %1540 = vmatprep.subr.bf16.mxu0 %v1089
        %1541 = vmatpush1.bf16.msra.mxu0 %v1088
        %1542 = vmatprep.subr.bf16.mxu0 %v1097
        %1543 = vmatpush1.bf16.msra.mxu0 %v1096
        %1544 = vmatprep.subr.bf16.mxu0 %v1105
        %1545 = vmatpush1.bf16.msra.mxu0 %v1104
        %1546 = vmatprep.subr.bf16.mxu0 %v1113
        %1547 = vmatpush1.bf16.msra.mxu0 %v1112
        %1548 = vmatprep.subr.bf16.mxu0 %v1121
        %1549 = vmatpush1.bf16.msra.mxu0 %v1120
        %1550 = vmatprep.subr.bf16.mxu0 %v1129
        %1551 = vmatpush1.bf16.msra.mxu0 %v1128
        %1552 = vmatprep.subr.bf16.mxu0 %v1137
        %1553 = vmatpush1.bf16.msra.mxu0 %v1136
        %1554 = vmatprep.subr.bf16.mxu0 %v1145
        %1555 = vmatpush1.bf16.msra.mxu0 %v1144
        %1556 = vmatprep.subr.bf16.mxu0 %v1153
        %1557 = vmatpush1.bf16.msra.mxu0 %v1152
        %1558 = vmatprep.subr.bf16.mxu0 %v1161
        %1559 = vmatpush1.bf16.msra.mxu0 %v1160
        %1560 = vmatprep.subr.bf16.mxu0 %v1169
        %1561 = vmatpush1.bf16.msra.mxu0 %v1168
        %1562 = vmatprep.subr.bf16.mxu0 %v1177
        %1563 = vmatpush1.bf16.msra.mxu0 %v1176
        %1564 = vmatprep.subr.bf16.mxu0 %v1185
        %1565 = vmatpush1.bf16.msra.mxu0 %v1184
        %1566 = vmatprep.subr.bf16.mxu0 %v1193
        %1567 = vmatpush1.bf16.msra.mxu0 %v1192
        %1568 = vmatprep.subr.bf16.mxu0 %v1201
        %1569 = vmatpush1.bf16.msra.mxu0 %v1200
        %1570 = vmatprep.subr.bf16.mxu0 %v1209
        %1571 = vmatpush1.bf16.msra.mxu0 %v1208
        %1572 = vmatprep.mubr.bf16.mxu0 %v506
        %1573 = vmatmul.mubr.bf16.gmra.mrb[0].mxu0 %v505
        %v1574 = vpop.f32.mrb[0].mxu0
        %v1575 = vadd.f32 0.0, %v1574
        %v1576 = vpop.f32.mrb[0].mxu0
        %v1577 = vadd.f32 0.0, %v1576
        %v1578 = vpop.f32.mrb[0].mxu0
        %v1579 = vpop.f32.mrb[0].mxu0
        %1580 = vdwg.mxu0
        %1581 = vmatprep.subr.bf16.mxu0 %v1217
        %1582 = vmatpush1.bf16.msra.mxu0 %v1216
        %1583 = vmatprep.subr.bf16.mxu0 %v1225
        %1584 = vmatpush1.bf16.msra.mxu0 %v1224
        %1585 = vmatprep.subr.bf16.mxu0 0
        %1586 = vmatpush1.bf16.msra.mxu0 0
        %1587 = vmatprep.subr.bf16.mxu0 0
        %1588 = vmatpush1.bf16.msra.mxu0 0
        %1589 = vmatprep.subr.bf16.mxu0 0
        %1590 = vmatpush1.bf16.msra.mxu0 0
        %1591 = vmatprep.subr.bf16.mxu0 0
        %1592 = vmatpush1.bf16.msra.mxu0 0
        %1593 = vmatprep.subr.bf16.mxu0 0
        %1594 = vmatpush1.bf16.msra.mxu0 0
        %1595 = vmatprep.subr.bf16.mxu0 0
        %1596 = vmatpush1.bf16.msra.mxu0 0
        %1597 = vmatprep.subr.bf16.mxu0 0
        %1598 = vmatpush1.bf16.msra.mxu0 0
        %1599 = vmatprep.subr.bf16.mxu0 0
        %1600 = vmatpush1.bf16.msra.mxu0 0
        %1601 = vmatprep.subr.bf16.mxu0 0
        %1602 = vmatpush1.bf16.msra.mxu0 0
        %1603 = vmatprep.subr.bf16.mxu0 0
        %1604 = vmatpush1.bf16.msra.mxu0 0
        %1605 = vmatprep.subr.bf16.mxu0 0
        %1606 = vmatpush1.bf16.msra.mxu0 0
        %1607 = vmatprep.subr.bf16.mxu0 0
        %1608 = vmatpush1.bf16.msra.mxu0 0
        %1609 = vmatprep.subr.bf16.mxu0 0
        %1610 = vmatpush1.bf16.msra.mxu0 0
        %1611 = vmatprep.subr.bf16.mxu0 0
        %1612 = vmatpush1.bf16.msra.mxu0 0
        %1613 = vmatprep.mubr.bf16.mxu0 0
        %1614 = vmatmul.mubr.bf16.gmra.mrb[0].mxu0 %v1374
        %v1615 = vpop.f32.mrb[0].mxu0
        %v1616 = vadd.f32 %v1575, %v1615
        %v1617 = vpop.f32.mrb[0].mxu0
        %v1618 = vadd.f32 %v1577, %v1617
        %v1619 = vpop.f32.mrb[0].mxu0
        %v1620 = vpop.f32.mrb[0].mxu0
        %1621 = vdwg.mxu0
        %1622 = vmatprep.subr.bf16.mxu0 %v1091
        %1623 = vmatpush1.bf16.msra.mxu0 %v1090
        %1624 = vmatprep.subr.bf16.mxu0 %v1099
        %1625 = vmatpush1.bf16.msra.mxu0 %v1098
        %1626 = vmatprep.subr.bf16.mxu0 %v1107
        %1627 = vmatpush1.bf16.msra.mxu0 %v1106
        %1628 = vmatprep.subr.bf16.mxu0 %v1115
        %1629 = vmatpush1.bf16.msra.mxu0 %v1114
        %1630 = vmatprep.subr.bf16.mxu0 %v1123
        %1631 = vmatpush1.bf16.msra.mxu0 %v1122
        %1632 = vmatprep.subr.bf16.mxu0 %v1131
        %1633 = vmatpush1.bf16.msra.mxu0 %v1130
        %1634 = vmatprep.subr.bf16.mxu0 %v1139
        %1635 = vmatpush1.bf16.msra.mxu0 %v1138
        %1636 = vmatprep.subr.bf16.mxu0 %v1147
        %1637 = vmatpush1.bf16.msra.mxu0 %v1146
        %1638 = vmatprep.subr.bf16.mxu0 %v1155
        %1639 = vmatpush1.bf16.msra.mxu0 %v1154
        %1640 = vmatprep.subr.bf16.mxu0 %v1163
        %1641 = vmatpush1.bf16.msra.mxu0 %v1162
        %1642 = vmatprep.subr.bf16.mxu0 %v1171
        %1643 = vmatpush1.bf16.msra.mxu0 %v1170
        %1644 = vmatprep.subr.bf16.mxu0 %v1179
        %1645 = vmatpush1.bf16.msra.mxu0 %v1178
        %1646 = vmatprep.subr.bf16.mxu0 %v1187
        %1647 = vmatpush1.bf16.msra.mxu0 %v1186
        %1648 = vmatprep.subr.bf16.mxu0 %v1195
        %1649 = vmatpush1.bf16.msra.mxu0 %v1194
        %1650 = vmatprep.subr.bf16.mxu0 %v1203
        %1651 = vmatpush1.bf16.msra.mxu0 %v1202
        %1652 = vmatprep.subr.bf16.mxu0 %v1211
        %1653 = vmatpush1.bf16.msra.mxu0 %v1210
        %1654 = vmatprep.mubr.bf16.mxu0 %v506
        %1655 = vmatmul.mubr.bf16.gmra.mrb[0].mxu0 %v505
        %v1656 = vpop.f32.mrb[0].mxu0
        %v1657 = vadd.f32 0.0, %v1656
        %v1658 = vpop.f32.mrb[0].mxu0
        %v1659 = vadd.f32 0.0, %v1658
        %v1660 = vpop.f32.mrb[0].mxu0
        %v1661 = vpop.f32.mrb[0].mxu0
        %1662 = vdwg.mxu0
        %1663 = vmatprep.subr.bf16.mxu0 %v1219
        %1664 = vmatpush1.bf16.msra.mxu0 %v1218
        %1665 = vmatprep.subr.bf16.mxu0 %v1227
        %1666 = vmatpush1.bf16.msra.mxu0 %v1226
        %1667 = vmatprep.subr.bf16.mxu0 0
        %1668 = vmatpush1.bf16.msra.mxu0 0
        %1669 = vmatprep.subr.bf16.mxu0 0
        %1670 = vmatpush1.bf16.msra.mxu0 0
        %1671 = vmatprep.subr.bf16.mxu0 0
        %1672 = vmatpush1.bf16.msra.mxu0 0
        %1673 = vmatprep.subr.bf16.mxu0 0
        %1674 = vmatpush1.bf16.msra.mxu0 0
        %1675 = vmatprep.subr.bf16.mxu0 0
        %1676 = vmatpush1.bf16.msra.mxu0 0
        %1677 = vmatprep.subr.bf16.mxu0 0
        %1678 = vmatpush1.bf16.msra.mxu0 0
        %1679 = vmatprep.subr.bf16.mxu0 0
        %1680 = vmatpush1.bf16.msra.mxu0 0
        %1681 = vmatprep.subr.bf16.mxu0 0
        %1682 = vmatpush1.bf16.msra.mxu0 0
        %1683 = vmatprep.subr.bf16.mxu0 0
        %1684 = vmatpush1.bf16.msra.mxu0 0
        %1685 = vmatprep.subr.bf16.mxu0 0
        %1686 = vmatpush1.bf16.msra.mxu0 0
        %1687 = vmatprep.subr.bf16.mxu0 0
        %1688 = vmatpush1.bf16.msra.mxu0 0
        %1689 = vmatprep.subr.bf16.mxu0 0
        %1690 = vmatpush1.bf16.msra.mxu0 0
        %1691 = vmatprep.subr.bf16.mxu0 0
        %1692 = vmatpush1.bf16.msra.mxu0 0
        %1693 = vmatprep.subr.bf16.mxu0 0
        %1694 = vmatpush1.bf16.msra.mxu0 0
        %1695 = vmatprep.mubr.bf16.mxu0 0
        %1696 = vmatmul.mubr.bf16.gmra.mrb[0].mxu0 %v1374
        %v1697 = vpop.f32.mrb[0].mxu0
        %v1698 = vadd.f32 %v1657, %v1697
        %v1699 = vpop.f32.mrb[0].mxu0
        %v1700 = vadd.f32 %v1659, %v1699
        %v1701 = vpop.f32.mrb[0].mxu0
        %v1702 = vpop.f32.mrb[0].mxu0
        %1703 = vdwg.mxu0
        %v1704 = vmax.f32 %v1452, %v1534
        %v1705 = vmax.f32 %v1454, %v1536
        %v1706 = vmax.f32 %v1616, %v1698
        %v1707 = vmax.f32 %v1618, %v1700
        %v1708 = vmax.f32 %v1704, %v1706
        %v1709 = vmax.f32 %v1705, %v1707
        %v1710 = vld [vmem:[%s4] sm:$0x3]
        %v1712 = vlaneseq
        %v1713 = vshrl.u32 %v1712, 7
        %v1714 = vsub.s32 0, %v1713
        %v1715 = vrot.slane %v1710, %v1714
        %v1716 = vlaneseq
        %v1717 = vshrl.u32 %v1716, 7
        %v1718 = vsub.s32 1, %v1717
        %v1719 = vrot.slane %v1710, %v1718
        %v1722 = vadd.f32 %v1708, %v1715
        %v1723 = vadd.f32 %v1709, %v1719
        %v1724 = vmax.f32 %v1722, 0.0
        %v1725 = vmax.f32 %v1723, 0.0
        %v1726 = vpack.c.bf16 %v1724, %v1724
        %v1727 = vpack.c.bf16 %v1725, %v1725
        %v1728 = vld [vmem:[%s5] sm:$0xf]
        %v1729 = vld [vmem:[%s5 + $0x4] sm:$0xf]
        %v1730 = vld [vmem:[%s5 + $0x8] sm:$0xf]
        %v1731 = vld [vmem:[%s5 + $0xc] sm:$0xf]
        %v1732 = vld [vmem:[%s5 + $0x10] sm:$0xf]
        %v1733 = vld [vmem:[%s5 + $0x14] sm:$0xf]
        %v1734 = vld [vmem:[%s5 + $0x18] sm:$0xf]
        %v1735 = vld [vmem:[%s5 + $0x1c] sm:$0xf]
        %v1736 = vld [vmem:[%s5 + $0x20] sm:$0xf]
        %v1737 = vld [vmem:[%s5 + $0x24] sm:$0xf]
        %v1738 = vld [vmem:[%s5 + $0x28] sm:$0xf]
        %v1739 = vld [vmem:[%s5 + $0x2c] sm:$0xf]
        %v1740 = vld [vmem:[%s5 + $0x30] sm:$0xf]
        %v1741 = vld [vmem:[%s5 + $0x34] sm:$0xf]
        %v1742 = vld [vmem:[%s5 + $0x38] sm:$0xf]
        %v1743 = vld [vmem:[%s5 + $0x3c] sm:$0xf]
        %v1744 = vld [vmem:[%s5 + $0x40] sm:$0xf]
        %v1745 = vld [vmem:[%s5 + $0x44] sm:$0xf]
        %v1746 = vld [vmem:[%s5 + $0x48] sm:$0xf]
        %v1747 = vld [vmem:[%s5 + $0x4c] sm:$0xf]
        %v1748 = vld [vmem:[%s5 + $0x50] sm:$0xf]
        %v1749 = vld [vmem:[%s5 + $0x54] sm:$0xf]
        %v1750 = vld [vmem:[%s5 + $0x58] sm:$0xf]
        %v1751 = vld [vmem:[%s5 + $0x5c] sm:$0xf]
        %v1752 = vld [vmem:[%s5 + $0x60] sm:$0xf]
        %v1753 = vld [vmem:[%s5 + $0x64] sm:$0xf]
        %v1754 = vld [vmem:[%s5 + $0x68] sm:$0xf]
        %v1755 = vld [vmem:[%s5 + $0x6c] sm:$0xf]
        %v1756 = vld [vmem:[%s5 + $0x70] sm:$0xf]
        %v1757 = vld [vmem:[%s5 + $0x74] sm:$0xf]
        %v1758 = vld [vmem:[%s5 + $0x78] sm:$0xf]
        %v1759 = vld [vmem:[%s5 + $0x7c] sm:$0xf]
        %v1760 = vld [vmem:[%s6] sm:$0x1]
        %v1793 = vunpack.c.l.b16 %v1728
        %v1794 = vunpack.c.l.b16 %v1729
        %v1795 = vunpack.c.l.b16 %v1730
        %v1796 = vunpack.c.l.b16 %v1731
        %v1797 = vunpack.c.l.b16 %v1732
        %v1798 = vunpack.c.l.b16 %v1733
        %v1799 = vunpack.c.l.b16 %v1734
        %v1800 = vunpack.c.l.b16 %v1735
        %v1801 = vunpack.c.l.b16 %v1736
        %v1802 = vunpack.c.l.b16 %v1737
        %v1803 = vunpack.c.l.b16 %v1738
        %v1804 = vunpack.c.l.b16 %v1739
        %v1805 = vunpack.c.l.b16 %v1740
        %v1806 = vunpack.c.l.b16 %v1741
        %v1807 = vunpack.c.l.b16 %v1742
        %v1808 = vunpack.c.l.b16 %v1743
        %v1809 = vunpack.c.l.b16 %v1744
        %v1810 = vunpack.c.l.b16 %v1745
        %v1811 = vunpack.c.l.b16 %v1746
        %v1812 = vunpack.c.l.b16 %v1747
        %v1813 = vunpack.c.l.b16 %v1748
        %v1814 = vunpack.c.l.b16 %v1749
        %v1815 = vunpack.c.l.b16 %v1750
        %v1816 = vunpack.c.l.b16 %v1751
        %v1817 = vunpack.c.l.b16 %v1752
        %v1818 = vunpack.c.l.b16 %v1753
        %v1819 = vunpack.c.l.b16 %v1754
        %v1820 = vunpack.c.l.b16 %v1755
        %v1821 = vunpack.c.l.b16 %v1756
        %v1822 = vunpack.c.l.b16 %v1757
        %v1823 = vunpack.c.l.b16 %v1758
        %v1824 = vunpack.c.l.b16 %v1759
        %v1825 = vpack.c.b16 %v1794, %v1793
        %v1826 = vpack.c.b16 %v1796, %v1795
        %v1827 = vpack.c.b16 %v1798, %v1797
        %v1828 = vpack.c.b16 %v1800, %v1799
        %v1829 = vpack.c.b16 %v1802, %v1801
        %v1830 = vpack.c.b16 %v1804, %v1803
        %v1831 = vpack.c.b16 %v1806, %v1805
        %v1832 = vpack.c.b16 %v1808, %v1807
        %v1833 = vpack.c.b16 %v1810, %v1809
        %v1834 = vpack.c.b16 %v1812, %v1811
        %v1835 = vpack.c.b16 %v1814, %v1813
        %v1836 = vpack.c.b16 %v1816, %v1815
        %v1837 = vpack.c.b16 %v1818, %v1817
        %v1838 = vpack.c.b16 %v1820, %v1819
        %v1839 = vpack.c.b16 %v1822, %v1821
        %v1840 = vpack.c.b16 %v1824, %v1823
        %1857 = vmatprep.subr.bf16.mxu0 0
        %1858 = vmatpush1.bf16.msra.mxu0 %v1825
        %1859 = vmatprep.subr.bf16.mxu0 0
        %1860 = vmatpush1.bf16.msra.mxu0 %v1826
        %1861 = vmatprep.subr.bf16.mxu0 0
        %1862 = vmatpush1.bf16.msra.mxu0 %v1827
        %1863 = vmatprep.subr.bf16.mxu0 0
        %1864 = vmatpush1.bf16.msra.mxu0 %v1828
        %1865 = vmatprep.subr.bf16.mxu0 0
        %1866 = vmatpush1.bf16.msra.mxu0 %v1829
        %1867 = vmatprep.subr.bf16.mxu0 0
        %1868 = vmatpush1.bf16.msra.mxu0 %v1830
        %1869 = vmatprep.subr.bf16.mxu0 0
        %1870 = vmatpush1.bf16.msra.mxu0 %v1831
        %1871 = vmatprep.subr.bf16.mxu0 0
        %1872 = vmatpush1.bf16.msra.mxu0 %v1832
        %1873 = vmatprep.subr.bf16.mxu0 0
        %1874 = vmatpush1.bf16.msra.mxu0 %v1833
        %1875 = vmatprep.subr.bf16.mxu0 0
        %1876 = vmatpush1.bf16.msra.mxu0 %v1834
        %1877 = vmatprep.subr.bf16.mxu0 0
        %1878 = vmatpush1.bf16.msra.mxu0 %v1835
        %1879 = vmatprep.subr.bf16.mxu0 0
        %1880 = vmatpush1.bf16.msra.mxu0 %v1836
        %1881 = vmatprep.subr.bf16.mxu0 0
        %1882 = vmatpush1.bf16.msra.mxu0 %v1837
        %1883 = vmatprep.subr.bf16.mxu0 0
        %1884 = vmatpush1.bf16.msra.mxu0 %v1838
        %1885 = vmatprep.subr.bf16.mxu0 0
        %1886 = vmatpush1.bf16.msra.mxu0 %v1839
        %1887 = vmatprep.subr.bf16.mxu0 0
        %1888 = vmatpush1.bf16.msra.mxu0 %v1840
        %1889 = vmatprep.mubr.bf16.mxu0 %v1727
        %1890 = vmatmul.mubr.bf16.gmra.mrb[0].mxu0 %v1726
        %v1891 = vpop.f32.mrb[0].mxu0
        %v1892 = vadd.f32 %v1760, %v1891
        %v1893 = vpop.f32.mrb[0].mxu0
        %v1894 = vpop.f32.mrb[0].mxu0
        %v1895 = vpop.f32.mrb[0].mxu0
        %1896 = vdwg.mxu0
        %v1897 = vmax.f32 %v1892, 0.0
        %v1898 = vld [vmem:[%s7] sm:$0xff]
        %v1899 = vld [vmem:[%s7 + $0x8] sm:$0xff]
        %v1900 = vld [vmem:[%s7 + $0x10] sm:$0xff]
        %v1901 = vld [vmem:[%s7 + $0x18] sm:$0xff]
        %v1902 = vld [vmem:[%s7 + $0x20] sm:$0xff]
        %v1903 = vld [vmem:[%s7 + $0x28] sm:$0xff]
        %v1904 = vld [vmem:[%s7 + $0x30] sm:$0xff]
        %v1905 = vld [vmem:[%s7 + $0x38] sm:$0xff]
        %v1906 = vld [vmem:[%s8] sm:$0x1]
        %vm1907 = vcmask 523264
        %v1909 = vsel %vm1907, %v1897, 0
        %1911 = vmatprep.subr.mxu0 0.0
        %1912 = vmatpush1.msra.mxu0 %v1898
        %1913 = vmatprep.subr.mxu0 0.0
        %1914 = vmatpush1.msra.mxu0 %v1899
        %1915 = vmatprep.subr.mxu0 0.0
        %1916 = vmatpush1.msra.mxu0 %v1900
        %1917 = vmatprep.subr.mxu0 0.0
        %1918 = vmatpush1.msra.mxu0 %v1901
        %1919 = vmatprep.subr.mxu0 0.0
        %1920 = vmatpush1.msra.mxu0 %v1902
        %1921 = vmatprep.subr.mxu0 0.0
        %1922 = vmatpush1.msra.mxu0 %v1903
        %1923 = vmatprep.subr.mxu0 0.0
        %1924 = vmatpush1.msra.mxu0 %v1904
        %1925 = vmatprep.subr.mxu0 0.0
        %1926 = vmatpush1.msra.mxu0 %v1905
        %1927 = vmatprep.subr.mxu0 0.0
        %1928 = vmatpush1.msra.mxu0 0.0
        %1929 = vmatprep.subr.mxu0 0.0
        %1930 = vmatpush1.msra.mxu0 0.0
        %1931 = vmatprep.subr.mxu0 0.0
        %1932 = vmatpush1.msra.mxu0 0.0
        %1933 = vmatprep.subr.mxu0 0.0
        %1934 = vmatpush1.msra.mxu0 0.0
        %1935 = vmatprep.subr.mxu0 0.0
        %1936 = vmatpush1.msra.mxu0 0.0
        %1937 = vmatprep.subr.mxu0 0.0
        %1938 = vmatpush1.msra.mxu0 0.0
        %1939 = vmatprep.subr.mxu0 0.0
        %1940 = vmatpush1.msra.mxu0 0.0
        %1941 = vmatprep.subr.mxu0 0.0
        %1942 = vmatpush1.msra.mxu0 0.0
        %1943 = vmatprep.subr.mxu0 0.0
        %1944 = vmatpush1.msra.mxu0 0.0
        %1945 = vmatprep.subr.mxu0 0.0
        %1946 = vmatpush1.msra.mxu0 0.0
        %1947 = vmatprep.subr.mxu0 0.0
        %1948 = vmatpush1.msra.mxu0 0.0
        %1949 = vmatprep.subr.mxu0 0.0
        %1950 = vmatpush1.msra.mxu0 0.0
        %1951 = vmatprep.subr.mxu0 0.0
        %1952 = vmatpush1.msra.mxu0 0.0
        %1953 = vmatprep.subr.mxu0 0.0
        %1954 = vmatpush1.msra.mxu0 0.0
        %1955 = vmatprep.subr.mxu0 0.0
        %1956 = vmatpush1.msra.mxu0 0.0
        %1957 = vmatprep.subr.mxu0 0.0
        %1958 = vmatpush1.msra.mxu0 0.0
        %1959 = vmatprep.subr.mxu0 0.0
        %1960 = vmatpush1.msra.mxu0 0.0
        %1961 = vmatprep.subr.mxu0 0.0
        %1962 = vmatpush1.msra.mxu0 0.0
        %1963 = vmatprep.subr.mxu0 0.0
        %1964 = vmatpush1.msra.mxu0 0.0
        %1965 = vmatprep.subr.mxu0 0.0
        %1966 = vmatpush1.msra.mxu0 0.0
        %1967 = vmatprep.subr.mxu0 0.0
        %1968 = vmatpush1.msra.mxu0 0.0
        %1969 = vmatprep.subr.mxu0 0.0
        %1970 = vmatpush1.msra.mxu0 0.0
        %1971 = vmatprep.subr.mxu0 0.0
        %1972 = vmatpush1.msra.mxu0 0.0
        %1973 = vmatprep.subr.mxu0 0.0
        %1974 = vmatpush1.msra.mxu0 0.0
        %1975 = vmatprep.mubr.f32.mxu0 0.0
        %1976 = vmatmul.mubr.f32.gmra.mrb[0].mxu0 %v1909
        %v1977 = vpop.f32.mrb[0].mxu0
        %v1978 = vadd.f32 %v1906, %v1977
        %v1979 = vpop.f32.mrb[0].mxu0
        %1980 = vdwg.mxu0
        %vm1981 = vcmask 8192
        %1982 = vst.msk [vmem:[%s324] sm:$0x1] %vm1981, %v1978
        %s1983 = sand.u32 %s225, 1
        %s1984 = scalar_lea.sflag [#allocation3], %s1983
        %s1985 = sand.u32 %s225, 1
        %s1986 = scalar_lea.vmem [#allocation2], %s1985
        // Predicated region
        $region57: #{hybrid_qnn_shallow_forward.1} parent=55 // pred_check
          %p1987 = pneg %p235
        $region58: #{hybrid_qnn_shallow_forward.1} parent=55 // pred_check_branch
          %1989 = sbr.rel (%p1987) target = $region60
        $region59: #{hybrid_qnn_shallow_forward.1} parent=55 // pred_region
          %s1991 = ssub.s32 16, 16
          %1992 = vsyncadd %s1984, %s1991
          %s1993 = smul.addr %s23, 16
          %s1994 = scalar_lea.hbm %s9, %s1993
          %s1996 = sshll.u32 %s1986, 4
          %s1997 = int_to_ptr.vmem [resolvable:$true] %s1996
          %1999 = dma.vmem_to_hbm [thread:$0]  %s1997, 16, %s1994, %s1984
        $region60: #{hybrid_qnn_shallow_forward.1} parent=55 // pred_fallthru
          _
      $region56: #{hybrid_qnn_shallow_forward.1} parent=5 // pred_fallthru
        _
      %p2000 = scmp.le.s32.totalorder 2, %s18
      // Predicated region
      $region61: #{hybrid_qnn_shallow_forward.1} parent=5 // pred_check
        %p2001 = pneg %p2000
      $region62: #{hybrid_qnn_shallow_forward.1} parent=5 // pred_check_branch
        %2003 = sbr.rel (%p2001) target = $region64
      $region63: #{hybrid_qnn_shallow_forward.1} parent=5 // pred_region
        %s2004 = ssub.s32 %s18, 2
        // Predicated region
        $region65: #{hybrid_qnn_shallow_forward.1} parent=63 // pred_check
          %p2005 = pneg %p241
        $region66: #{hybrid_qnn_shallow_forward.1} parent=63 // pred_check_branch
          %2007 = sbr.rel (%p2005) target = $region68
        $region67: #{hybrid_qnn_shallow_forward.1} parent=63 // pred_region
          %s2008 = sand.u32 %s226, 1
          %s2009 = scalar_lea.sflag [#allocation3], %s2008
          %s2010 = sand.u32 %s226, 1
          %s2011 = scalar_lea.vmem [#allocation2], %s2010
          %2012 = dma.done %s2009, 16
        $region68: #{hybrid_qnn_shallow_forward.1} parent=63 // pred_fallthru
          _
      $region64: #{hybrid_qnn_shallow_forward.1} parent=5 // pred_fallthru
        _
    $region6: #{hybrid_qnn_shallow_forward.1} parent=1 // loop_footer
      %s22 = sadd.s32 1, %s18
    $region7: #{hybrid_qnn_shallow_forward.1} parent=1 // loop_footer_branch
      %17 = sbr.rel target = $region3
    $region8: #{hybrid_qnn_shallow_forward.1} parent=1 // loop_exit
      _
    %2013 = vsyncpa [#allocation3], 1
    %s2014 = scalar_lea.sflag [#allocation3], 1
    %2015 = vsyncpa %s2014, 1

</llo_original>
